<compile_context>
chip_gen: v6e
topology: v6e:2x2x1
jax: 0.10.0
libtpu: 0.0.40
codegen_flags: <defaults>
</compile_context>

<pallas_src>
import math
import functools

import jax
import jax.numpy as jnp
from jax.experimental import pallas as pl
from jax.experimental.pallas import tpu as pltpu


_VMEM_LIMIT = 32 * 1024 * 1024  # explicit scoped-VMEM budget; fits v5e/v6e/v7x


# ----------------------------------------------------------------------------
# tiling helpers
# ----------------------------------------------------------------------------
def _choose_tile(dim, target, align):
    """Largest `align`-multiple tile <= target that divides `dim` (or dim itself)."""
    if dim <= target:
        return dim
    start = max(align, target - target % align)
    for cand in range(start, 0, -align):
        if dim % cand == 0:
            return cand
    # TODO(synk): pad/mask ragged tails instead of one full-dimension block.
    return dim


def _head_group(n_head, head_dim, target=512):
    """# heads per projection grid step (keeps hg*Dh ~ target to bound x re-reads)."""
    hg = 1
    for cand in range(1, n_head + 1):
        if n_head % cand == 0 and cand * head_dim <= target:
            hg = cand
    return hg


# ----------------------------------------------------------------------------
# fused QKV projection: writes [B, H, L, Dh] directly (attention-ready layout)
# ----------------------------------------------------------------------------
def _qkv_proj_kernel(xq_ref, xk_ref, xv_ref, wq_ref, wk_ref, wv_ref,
                     bq_ref, bk_ref, bv_ref,
                     oq_ref, ok_ref, ov_ref,
                     accq, acck, accv, *, hg):
    kk = pl.program_id(3)

    @pl.when(kk == 0)
    def _():
        accq[...] = jnp.zeros_like(accq)
        acck[...] = jnp.zeros_like(acck)
        accv[...] = jnp.zeros_like(accv)

    xq = xq_ref[0]          # (tm, tk)
    xk = xk_ref[0]
    xv = xv_ref[0]
    for g in range(hg):     # unrolled: hg is a small static int
        accq[g] += jnp.dot(xq, wq_ref[g], preferred_element_type=jnp.float32)
        acck[g] += jnp.dot(xk, wk_ref[g], preferred_element_type=jnp.float32)
        accv[g] += jnp.dot(xv, wv_ref[g], preferred_element_type=jnp.float32)

    @pl.when(kk == pl.num_programs(3) - 1)
    def _():
        oq_ref[0] = (accq[...] + bq_ref[...]).astype(oq_ref.dtype)
        ok_ref[0] = (acck[...] + bk_ref[...]).astype(ok_ref.dtype)
        ov_ref[0] = (accv[...] + bv_ref[...]).astype(ov_ref.dtype)


def pallas_qkv_proj(xq, xk, xv, wq3, wk3, wv3, bq3, bk3, bv3, *, out_dtype,
                    l_block=256, k_block=512):
    """x*: [B, L, D]; w*: [H, D, Dh]; b*: [H, 1, Dh] -> three [B, H, L, Dh]."""
    B, L, D = xq.shape
    H, _, Dh = wq3.shape
    hg = _head_group(H, Dh)
    tm = _choose_tile(L, l_block, 8)
    tk = _choose_tile(D, k_block, 128)

    x_spec = pl.BlockSpec((1, tm, tk), lambda b, i, hj, kk: (b, i, kk))
    w_spec = pl.BlockSpec((hg, tk, Dh), lambda b, i, hj, kk: (hj, kk, 0))
    b_spec = pl.BlockSpec((hg, 1, Dh), lambda b, i, hj, kk: (hj, 0, 0))
    o_spec = pl.BlockSpec((1, hg, tm, Dh), lambda b, i, hj, kk: (b, hj, i, 0))
    out_sds = jax.ShapeDtypeStruct((B, H, L, Dh), out_dtype)

    return pl.pallas_call(
        functools.partial(_qkv_proj_kernel, hg=hg),
        out_shape=(out_sds, out_sds, out_sds),
        grid=(B, L // tm, H // hg, D // tk),
        in_specs=[x_spec, x_spec, x_spec, w_spec, w_spec, w_spec,
                  b_spec, b_spec, b_spec],
        out_specs=(o_spec, o_spec, o_spec),
        scratch_shapes=[pltpu.VMEM((hg, tm, Dh), jnp.float32)] * 3,
        compiler_params=pltpu.CompilerParams(
            dimension_semantics=("parallel", "parallel", "parallel", "arbitrary"),
            vmem_limit_bytes=_VMEM_LIMIT),
    )(xq, xk, xv, wq3, wk3, wv3, bq3, bk3, bv3)


# ----------------------------------------------------------------------------
# flash-style attention: grid (B, H, L/tq, L/tk); no in-kernel relayouts
# ----------------------------------------------------------------------------
def _attn_kernel(*refs, tq, tk, min_val, use_mask):
    if use_mask:
        pmq_ref, pmk_ref, q_ref, k_ref, v_ref, o_ref, m_sc, l_sc, acc_sc = refs
    else:
        q_ref, k_ref, v_ref, o_ref, m_sc, l_sc, acc_sc = refs

    qi = pl.program_id(2)
    ki = pl.program_id(3)
    nk = pl.num_programs(3)

    @pl.when(ki == 0)
    def _():
        m_sc[...] = jnp.full_like(m_sc, -jnp.inf)
        l_sc[...] = jnp.zeros_like(l_sc)
        acc_sc[...] = jnp.zeros_like(acc_sc)

    def process_block():
        q = q_ref[0, 0]     # (tq, Dh) -- already MXU-ready, no swapaxes
        k = k_ref[0, 0]     # (tk, Dh)
        v = v_ref[0, 0]     # (tk, Dh)

        # Scores contract the last dims of both operands (no k.T relayout).
        # 1/sqrt(Dh) is already folded into the Q projection weights.
        s = jax.lax.dot_general(q, k, (((1,), (1,)), ((), ())),
                                preferred_element_type=jnp.float32)   # (tq, tk)

        if use_mask:
            pad_q = pmq_ref[0] > 0.5          # (tq, 1)
            pad_k = pmk_ref[0] > 0.5          # (1, tk)
            rows = qi * tq + jax.lax.broadcasted_iota(jnp.int32, (tq, tk), 0)
            cols = ki * tk + jax.lax.broadcasted_iota(jnp.int32, (tq, tk), 1)
            s = jnp.where(pad_q & pad_k & (rows >= cols), s, min_val)

        m_prev = m_sc[...]
        m_new = jnp.maximum(m_prev, jnp.max(s, axis=-1, keepdims=True))
        alpha = jnp.exp(m_prev - m_new)
        p = jnp.exp(s - m_new)
        l_sc[...] = alpha * l_sc[...] + jnp.sum(p, axis=-1, keepdims=True)
        acc_sc[...] = alpha * acc_sc[...] + jnp.dot(
            p.astype(v.dtype), v, preferred_element_type=jnp.float32)
        m_sc[...] = m_new

    if use_mask:
        # Compute-skip KV blocks entirely above the causal diagonal; their DMAs
        # are elided via the clamped K/V index_maps in pallas_attention.
        @pl.when(ki * tk <= qi * tq + (tq - 1))
        def _():
            process_block()
    else:
        process_block()

    @pl.when(ki == nk - 1)
    def _():
        # Post-PV rescale: tq*Dh EUP reciprocals instead of tq*tk VPU divisions.
        inv_l = pl.reciprocal(l_sc[...], approx=True)
        o_ref[0, 0] = (acc_sc[...] * inv_l).astype(o_ref.dtype)


def pallas_attention(q4, k4, v4, padding_mask, *, use_mask,
                     q_block=128, kv_block=128):
    """q4/k4/v4: [B, H, L, Dh]; padding_mask: [B, L] bool -> out [B, H, L, Dh].

    Defaults (128) are the safe choice for v5e/v7x; on v6e (128 MiB VMEM)
    q_block=kv_block=256 is a good setting.
    """
    B, H, L, Dh = q4.shape
    tq = _choose_tile(L, q_block, 8)
    tk = _choose_tile(L, kv_block, 128)   # 128-aligned: it is the pmk block's lane dim
    min_val = float(jnp.finfo(jnp.float32).min)

    kernel = functools.partial(_attn_kernel, tq=tq, tk=tk, min_val=min_val,
                               use_mask=use_mask)

    q_spec = pl.BlockSpec((1, 1, tq, Dh), lambda b, h, qi, ki: (b, h, qi, 0))
    o_spec = pl.BlockSpec((1, 1, tq, Dh), lambda b, h, qi, ki: (b, h, qi, 0))

    if use_mask:
        # Clamp the block index of K/V (and key-mask) above the diagonal: the
        # skipped iterations re-map to the already-resident block, so Pallas
        # elides the DMA as well as the compute.
        def kv_map(b, h, qi, ki):
            return (b, h, jnp.minimum(ki, (qi * tq + tq - 1) // tk), 0)

        def pmk_map(b, h, qi, ki):
            return (b, 0, jnp.minimum(ki, (qi * tq + tq - 1) // tk))

        kv_spec = pl.BlockSpec((1, 1, tk, Dh), kv_map)
        pm_f = padding_mask.astype(jnp.float32)
        pmq = pm_f.reshape(B, L, 1)
        pmk = pm_f.reshape(B, 1, L)
        in_specs = [
            pl.BlockSpec((1, tq, 1), lambda b, h, qi, ki: (b, qi, 0)),
            pl.BlockSpec((1, 1, tk), pmk_map),
            q_spec, kv_spec, kv_spec,
        ]
        inputs = (pmq, pmk, q4, k4, v4)
    else:
        kv_spec = pl.BlockSpec((1, 1, tk, Dh), lambda b, h, qi, ki: (b, h, ki, 0))
        in_specs = [q_spec, kv_spec, kv_spec]
        inputs = (q4, k4, v4)

    return pl.pallas_call(
        kernel,
        out_shape=jax.ShapeDtypeStruct((B, H, L, Dh), q4.dtype),
        grid=(B, H, L // tq, L // tk),
        in_specs=in_specs,
        out_specs=o_spec,
        scratch_shapes=[pltpu.VMEM((tq, 1), jnp.float32),
                        pltpu.VMEM((tq, 1), jnp.float32),
                        pltpu.VMEM((tq, Dh), jnp.float32)],
        compiler_params=pltpu.CompilerParams(
            dimension_semantics=("parallel", "parallel", "parallel", "arbitrary"),
            vmem_limit_bytes=_VMEM_LIMIT),
    )(*inputs)


# ----------------------------------------------------------------------------
# output projection: consumes [B, H, L, Dh] directly (reduces over heads)
# ----------------------------------------------------------------------------
def _cproj_kernel(x_ref, w_ref, b_ref, o_ref, acc_ref, *, hg):
    hj = pl.program_id(3)

    @pl.when(hj == 0)
    def _():
        acc_ref[...] = jnp.zeros_like(acc_ref)

    for g in range(hg):     # unrolled: hg is a small static int
        acc_ref[...] += jnp.dot(x_ref[0, g], w_ref[g],
                                preferred_element_type=jnp.float32)

    @pl.when(hj == pl.num_programs(3) - 1)
    def _():
        o_ref[0] = (acc_ref[...] + b_ref[...]).astype(o_ref.dtype)


def pallas_cproj(x4, wp3, bp2, *, out_dtype, l_block=256, n_block=256):
    """x4: [B, H, L, Dh]; wp3: [H, Dh, N]; bp2: [1, N] -> out [B, L, N] (lane-dense)."""
    B, H, L, Dh = x4.shape
    N = wp3.shape[2]
    hg = _head_group(H, Dh)
    tm = _choose_tile(L, l_block, 8)
    tn = _choose_tile(N, n_block, 128)

    return pl.pallas_call(
        functools.partial(_cproj_kernel, hg=hg),
        out_shape=jax.ShapeDtypeStruct((B, L, N), out_dtype),
        grid=(B, L // tm, N // tn, H // hg),
        in_specs=[pl.BlockSpec((1, hg, tm, Dh), lambda b, i, j, hj: (b, hj, i, 0)),
                  pl.BlockSpec((hg, Dh, tn), lambda b, i, j, hj: (hj, 0, j)),
                  pl.BlockSpec((1, tn), lambda b, i, j, hj: (0, j))],
        out_specs=pl.BlockSpec((1, tm, tn), lambda b, i, j, hj: (b, i, j)),
        scratch_shapes=[pltpu.VMEM((tm, tn), jnp.float32)],
        compiler_params=pltpu.CompilerParams(
            dimension_semantics=("parallel", "parallel", "parallel", "arbitrary"),
            vmem_limit_bytes=_VMEM_LIMIT),
    )(x4, wp3, bp2)


# ----------------------------------------------------------------------------
# module wrapper
# ----------------------------------------------------------------------------
def init_params(key, input_dim, output_dim):
    ks = jax.random.split(key, 8)
    s_in = 1.0 / math.sqrt(input_dim)
    return {
        "wq": jax.random.uniform(ks[0], (input_dim, input_dim), jnp.float32, -s_in, s_in),
        "bq": jax.random.uniform(ks[1], (input_dim,), jnp.float32, -s_in, s_in),
        "wk": jax.random.uniform(ks[2], (input_dim, input_dim), jnp.float32, -s_in, s_in),
        "bk": jax.random.uniform(ks[3], (input_dim,), jnp.float32, -s_in, s_in),
        "wv": jax.random.uniform(ks[4], (input_dim, input_dim), jnp.float32, -s_in, s_in),
        "bv": jax.random.uniform(ks[5], (input_dim,), jnp.float32, -s_in, s_in),
        "wp": jax.random.uniform(ks[6], (input_dim, output_dim), jnp.float32, -s_in, s_in),
        "bp": jax.random.uniform(ks[7], (output_dim,), jnp.float32, -s_in, s_in),
    }


def sdp_attention_forward(params, q, k, v, padding_mask, *, n_head, if_train,
                          compute_dtype=jnp.bfloat16):
    B, L, D = q.shape
    H = n_head
    Dh = D // H
    N = params["wp"].shape[1]
    out_dtype = q.dtype
    scale = 1.0 / math.sqrt(Dh)
    cd = compute_dtype

    # One-time weight re-layouts (XLA, O(D^2), outside the kernels):
    #  * per-head [H, D, Dh] Q/K/V weights so the projection writes the
    #    attention-ready [B, H, L, Dh] layout (no HBM/VMEM transposes later),
    #  * 1/sqrt(Dh) folded into the Q weights/bias (no per-step score scaling),
    #  * activations / weights stored in compute_dtype (bf16 by default);
    #    biases stay f32 (added to the f32 accumulators).
    def head_w(w, s=1.0):
        return (w * s).reshape(D, H, Dh).transpose(1, 0, 2).astype(cd)

    def head_b(b, s=1.0):
        return (b * s).reshape(H, 1, Dh).astype(jnp.float32)

    wq3, bq3 = head_w(params["wq"], scale), head_b(params["bq"], scale)
    wk3, bk3 = head_w(params["wk"]), head_b(params["bk"])
    wv3, bv3 = head_w(params["wv"]), head_b(params["bv"])
    wp3 = params["wp"].reshape(H, Dh, N).astype(cd)
    bp2 = params["bp"].reshape(1, N).astype(jnp.float32)

    xq, xk, xv = q.astype(cd), k.astype(cd), v.astype(cd)

    # Fused Q/K/V projection -> three [B, H, L, Dh] tensors in compute_dtype.
    q4, k4, v4 = pallas_qkv_proj(xq, xk, xv, wq3, wk3, wv3, bq3, bk3, bv3,
                                 out_dtype=cd)

    # if_train=True: causal + padding mask built in-kernel from the [B, L] mask;
    # if_train=False: no mask (matches PyTorch attn_mask=None, is_causal=False).
    attn = pallas_attention(q4, k4, v4, padding_mask, use_mask=if_train)

    out = pallas_cproj(attn, wp3, bp2, out_dtype=out_dtype)
    # TODO(synk): attn_pdrop / resid_pdrop > 0 (stochastic dropout) not implemented;
    # with p=0 both dropouts are the identity, matching the PyTorch module.
    return out


# ----------------------------------------------------------------------------
# pure-JAX reference (correctness check only)
# ----------------------------------------------------------------------------
def reference_forward(params, q, k, v, padding_mask, *, n_head, if_train):
    B, L, D = q.shape
    Dh = D // n_head

    def proj(x, w, b):
        return (x @ w + b).reshape(B, L, n_head, Dh).transpose(0, 2, 1, 3)

    wq = proj(q, params["wq"], params["bq"])
    wk = proj(k, params["wk"], params["bk"])
    wv = proj(v, params["wv"], params["bv"])
    s = jnp.einsum("bhld,bhmd->bhlm", wq, wk) / math.sqrt(Dh)
    if if_train:
        pm = padding_mask.astype(bool)
        m = (pm[:, :, None] & pm[:, None, :])[:, None] & jnp.tril(jnp.ones((L, L), bool))
        s = jnp.where(m, s, jnp.finfo(jnp.float32).min)
    p = jax.nn.softmax(s, axis=-1)
    o = jnp.einsum("bhlm,bhmd->bhld", p, wv).transpose(0, 2, 1, 3).reshape(B, L, D)
    return o @ params["wp"] + params["bp"]


# ----------------------------------------------------------------------------
if __name__ == "__main__":
    input_dim, output_dim = 32, 32
    n_head = 4
    B, L = 2, 8

    key = jax.random.PRNGKey(0)
    kp, kq, kk_, kv = jax.random.split(key, 4)
    params = init_params(kp, input_dim, output_dim)

    q = jax.random.normal(kq, (B, L, input_dim), jnp.float32)
    k = jax.random.normal(kk_, (B, L, input_dim), jnp.float32)
    v = jax.random.normal(kv, (B, L, input_dim), jnp.float32)
    # padding mask: batch 0 fully valid, batch 1 has its last 2 positions padded
    padding_mask = jnp.array([[True] * L, [True] * (L - 2) + [False] * 2], dtype=jnp.bool_)

    # 1) training path (causal + padding mask), f32 end-to-end
    out = jax.block_until_ready(
        sdp_attention_forward(params, q, k, v, padding_mask,
                              n_head=n_head, if_train=True,
                              compute_dtype=jnp.float32))
    ref = reference_forward(params, q, k, v, padding_mask, n_head=n_head, if_train=True)
    assert out.shape == (B, L, output_dim)
    assert jnp.allclose(out, ref, atol=5e-3, rtol=5e-3), "train/f32 mismatch vs reference"

    # 2) training path with bf16 storage/MXU operands (f32 accumulation & softmax)
    out_bf16 = jax.block_until_ready(
        sdp_attention_forward(params, q, k, v, padding_mask,
                              n_head=n_head, if_train=True,
                              compute_dtype=jnp.bfloat16))
    assert jnp.allclose(out_bf16, ref, atol=1e-1, rtol=1e-1), "train/bf16 mismatch"

    # 3) inference path: mask work skipped entirely
    out_eval = jax.block_until_ready(
        sdp_attention_forward(params, q, k, v, padding_mask,
                              n_head=n_head, if_train=False,
                              compute_dtype=jnp.float32))
    ref_eval = reference_forward(params, q, k, v, padding_mask, n_head=n_head, if_train=False)
    assert jnp.allclose(out_eval, ref_eval, atol=5e-3, rtol=5e-3), "eval mismatch vs reference"

    print("KERNEL_OK")
</pallas_src>

<mosaic_0001>
module attributes {stable_mosaic.version = 11 : i64} {
  func.func @_qkv_proj_kernel(%arg0: i32, %arg1: i32, %arg2: i32, %arg3: i32, %arg4: memref<1x8x32xf32, #tpu.memory_space<vmem>>, %arg5: memref<1x8x32xf32, #tpu.memory_space<vmem>>, %arg6: memref<1x8x32xf32, #tpu.memory_space<vmem>>, %arg7: memref<4x32x8xf32, #tpu.memory_space<vmem>>, %arg8: memref<4x32x8xf32, #tpu.memory_space<vmem>>, %arg9: memref<4x32x8xf32, #tpu.memory_space<vmem>>, %arg10: memref<4x1x8xf32, #tpu.memory_space<vmem>>, %arg11: memref<4x1x8xf32, #tpu.memory_space<vmem>>, %arg12: memref<4x1x8xf32, #tpu.memory_space<vmem>>, %arg13: memref<1x4x8x8xf32, #tpu.memory_space<vmem>>, %arg14: memref<1x4x8x8xf32, #tpu.memory_space<vmem>>, %arg15: memref<1x4x8x8xf32, #tpu.memory_space<vmem>>, %arg16: memref<4x8x8xf32, #tpu.memory_space<vmem>>, %arg17: memref<4x8x8xf32, #tpu.memory_space<vmem>>, %arg18: memref<4x8x8xf32, #tpu.memory_space<vmem>>) attributes {dimension_semantics = [#tpu.dimension_semantics<parallel>, #tpu.dimension_semantics<parallel>, #tpu.dimension_semantics<parallel>, #tpu.dimension_semantics<arbitrary>], iteration_bounds = array<i64: 2, 1, 1, 1>, scalar_prefetch = 0 : i64, scratch_operands = 3 : i64, tpu.core_type = #tpu.core_type<tc>, window_params = [{transform_indices = @transform_0, window_bounds = array<i64: 1, 8, 32>}, {transform_indices = @transform_1, window_bounds = array<i64: 1, 8, 32>}, {transform_indices = @transform_2, window_bounds = array<i64: 1, 8, 32>}, {transform_indices = @transform_3, window_bounds = array<i64: 4, 32, 8>}, {transform_indices = @transform_4, window_bounds = array<i64: 4, 32, 8>}, {transform_indices = @transform_5, window_bounds = array<i64: 4, 32, 8>}, {transform_indices = @transform_6, window_bounds = array<i64: 4, 1, 8>}, {transform_indices = @transform_7, window_bounds = array<i64: 4, 1, 8>}, {transform_indices = @transform_8, window_bounds = array<i64: 4, 1, 8>}, {transform_indices = @transform_9, window_bounds = array<i64: 1, 4, 8, 8>}, {transform_indices = @transform_10, window_bounds = array<i64: 1, 4, 8, 8>}, {transform_indices = @transform_11, window_bounds = array<i64: 1, 4, 8, 8>}]} {
    %c0_i32 = arith.constant 0 : i32
    %0 = arith.cmpi eq, %arg3, %c0_i32 : i32
    %1 = arith.extui %0 : i1 to i32
    %c0_i32_0 = arith.constant 0 : i32
    %2 = arith.cmpi ne, %1, %c0_i32_0 : i32
    scf.if %2 {
      %cst_127 = arith.constant 0.000000e+00 : f32
      %120 = vector.broadcast %cst_127 : f32 to vector<4x8x8xf32>
      %c0_128 = arith.constant 0 : index
      %c0_129 = arith.constant 0 : index
      %c0_130 = arith.constant 0 : index
      %121 = vector.load %arg16[%c0_128, %c0_129, %c0_130] : memref<4x8x8xf32, #tpu.memory_space<vmem>>, vector<4x8x8xf32>
      tpu.vector_store %arg16[%c0_128, %c0_129, %c0_130], %120 {strides = array<i32>} : memref<4x8x8xf32, #tpu.memory_space<vmem>>, vector<4x8x8xf32>,
      %cst_131 = arith.constant 0.000000e+00 : f32
      %122 = vector.broadcast %cst_131 : f32 to vector<4x8x8xf32>
      %c0_132 = arith.constant 0 : index
      %c0_133 = arith.constant 0 : index
      %c0_134 = arith.constant 0 : index
      %123 = vector.load %arg17[%c0_132, %c0_133, %c0_134] : memref<4x8x8xf32, #tpu.memory_space<vmem>>, vector<4x8x8xf32>
      tpu.vector_store %arg17[%c0_132, %c0_133, %c0_134], %122 {strides = array<i32>} : memref<4x8x8xf32, #tpu.memory_space<vmem>>, vector<4x8x8xf32>,
      %cst_135 = arith.constant 0.000000e+00 : f32
      %124 = vector.broadcast %cst_135 : f32 to vector<4x8x8xf32>
      %c0_136 = arith.constant 0 : index
      %c0_137 = arith.constant 0 : index
      %c0_138 = arith.constant 0 : index
      %125 = vector.load %arg18[%c0_136, %c0_137, %c0_138] : memref<4x8x8xf32, #tpu.memory_space<vmem>>, vector<4x8x8xf32>
      tpu.vector_store %arg18[%c0_136, %c0_137, %c0_138], %124 {strides = array<i32>} : memref<4x8x8xf32, #tpu.memory_space<vmem>>, vector<4x8x8xf32>,
    } else {
    }
    %c0 = arith.constant 0 : index
    %c0_1 = arith.constant 0 : index
    %c0_2 = arith.constant 0 : index
    %3 = vector.load %arg4[%c0, %c0_1, %c0_2] : memref<1x8x32xf32, #tpu.memory_space<vmem>>, vector<1x8x32xf32>
    %4 = vector.shape_cast %3 : vector<1x8x32xf32> to vector<8x32xf32>
    %c0_3 = arith.constant 0 : index
    %c0_4 = arith.constant 0 : index
    %c0_5 = arith.constant 0 : index
    %5 = vector.load %arg5[%c0_3, %c0_4, %c0_5] : memref<1x8x32xf32, #tpu.memory_space<vmem>>, vector<1x8x32xf32>
    %6 = vector.shape_cast %5 : vector<1x8x32xf32> to vector<8x32xf32>
    %c0_6 = arith.constant 0 : index
    %c0_7 = arith.constant 0 : index
    %c0_8 = arith.constant 0 : index
    %7 = vector.load %arg6[%c0_6, %c0_7, %c0_8] : memref<1x8x32xf32, #tpu.memory_space<vmem>>, vector<1x8x32xf32>
    %8 = vector.shape_cast %7 : vector<1x8x32xf32> to vector<8x32xf32>
    %c0_9 = arith.constant 0 : index
    %c0_10 = arith.constant 0 : index
    %c0_11 = arith.constant 0 : index
    %9 = vector.load %arg16[%c0_9, %c0_10, %c0_11] : memref<4x8x8xf32, #tpu.memory_space<vmem>>, vector<1x8x8xf32>
    %10 = vector.shape_cast %9 : vector<1x8x8xf32> to vector<8x8xf32>
    %c0_12 = arith.constant 0 : index
    %c0_13 = arith.constant 0 : index
    %c0_14 = arith.constant 0 : index
    %11 = vector.load %arg7[%c0_12, %c0_13, %c0_14] : memref<4x32x8xf32, #tpu.memory_space<vmem>>, vector<1x32x8xf32>
    %12 = vector.shape_cast %11 : vector<1x32x8xf32> to vector<32x8xf32>
    %cst = arith.constant dense<0.000000e+00> : vector<8x8xf32>
    %13 = tpu.matmul %4, %12, %cst {dimension_numbers = #tpu.dot_dimension_numbers<[1], [0], [0], [1], [0, 0, 1, 1], [], []>} : vector<8x32xf32>, vector<32x8xf32>, vector<8x8xf32> -> vector<8x8xf32>
    %14 = arith.addf %10, %13 : vector<8x8xf32>
    %c0_15 = arith.constant 0 : index
    %c0_16 = arith.constant 0 : index
    %c0_17 = arith.constant 0 : index
    %15 = vector.load %arg16[%c0_15, %c0_16, %c0_17] : memref<4x8x8xf32, #tpu.memory_space<vmem>>, vector<1x8x8xf32>
    %16 = vector.shape_cast %15 : vector<1x8x8xf32> to vector<8x8xf32>
    %17 = vector.shape_cast %14 : vector<8x8xf32> to vector<1x8x8xf32>
    tpu.vector_store %arg16[%c0_15, %c0_16, %c0_17], %17 {strides = array<i32>} : memref<4x8x8xf32, #tpu.memory_space<vmem>>, vector<1x8x8xf32>,
    %c0_18 = arith.constant 0 : index
    %c0_19 = arith.constant 0 : index
    %c0_20 = arith.constant 0 : index
    %18 = vector.load %arg17[%c0_18, %c0_19, %c0_20] : memref<4x8x8xf32, #tpu.memory_space<vmem>>, vector<1x8x8xf32>
    %19 = vector.shape_cast %18 : vector<1x8x8xf32> to vector<8x8xf32>
    %c0_21 = arith.constant 0 : index
    %c0_22 = arith.constant 0 : index
    %c0_23 = arith.constant 0 : index
    %20 = vector.load %arg8[%c0_21, %c0_22, %c0_23] : memref<4x32x8xf32, #tpu.memory_space<vmem>>, vector<1x32x8xf32>
    %21 = vector.shape_cast %20 : vector<1x32x8xf32> to vector<32x8xf32>
    %cst_24 = arith.constant dense<0.000000e+00> : vector<8x8xf32>
    %22 = tpu.matmul %6, %21, %cst_24 {dimension_numbers = #tpu.dot_dimension_numbers<[1], [0], [0], [1], [0, 0, 1, 1], [], []>} : vector<8x32xf32>, vector<32x8xf32>, vector<8x8xf32> -> vector<8x8xf32>
    %23 = arith.addf %19, %22 : vector<8x8xf32>
    %c0_25 = arith.constant 0 : index
    %c0_26 = arith.constant 0 : index
    %c0_27 = arith.constant 0 : index
    %24 = vector.load %arg17[%c0_25, %c0_26, %c0_27] : memref<4x8x8xf32, #tpu.memory_space<vmem>>, vector<1x8x8xf32>
    %25 = vector.shape_cast %24 : vector<1x8x8xf32> to vector<8x8xf32>
    %26 = vector.shape_cast %23 : vector<8x8xf32> to vector<1x8x8xf32>
    tpu.vector_store %arg17[%c0_25, %c0_26, %c0_27], %26 {strides = array<i32>} : memref<4x8x8xf32, #tpu.memory_space<vmem>>, vector<1x8x8xf32>,
    %c0_28 = arith.constant 0 : index
    %c0_29 = arith.constant 0 : index
    %c0_30 = arith.constant 0 : index
    %27 = vector.load %arg18[%c0_28, %c0_29, %c0_30] : memref<4x8x8xf32, #tpu.memory_space<vmem>>, vector<1x8x8xf32>
    %28 = vector.shape_cast %27 : vector<1x8x8xf32> to vector<8x8xf32>
    %c0_31 = arith.constant 0 : index
    %c0_32 = arith.constant 0 : index
    %c0_33 = arith.constant 0 : index
    %29 = vector.load %arg9[%c0_31, %c0_32, %c0_33] : memref<4x32x8xf32, #tpu.memory_space<vmem>>, vector<1x32x8xf32>
    %30 = vector.shape_cast %29 : vector<1x32x8xf32> to vector<32x8xf32>
    %cst_34 = arith.constant dense<0.000000e+00> : vector<8x8xf32>
    %31 = tpu.matmul %8, %30, %cst_34 {dimension_numbers = #tpu.dot_dimension_numbers<[1], [0], [0], [1], [0, 0, 1, 1], [], []>} : vector<8x32xf32>, vector<32x8xf32>, vector<8x8xf32> -> vector<8x8xf32>
    %32 = arith.addf %28, %31 : vector<8x8xf32>
    %c0_35 = arith.constant 0 : index
    %c0_36 = arith.constant 0 : index
    %c0_37 = arith.constant 0 : index
    %33 = vector.load %arg18[%c0_35, %c0_36, %c0_37] : memref<4x8x8xf32, #tpu.memory_space<vmem>>, vector<1x8x8xf32>
    %34 = vector.shape_cast %33 : vector<1x8x8xf32> to vector<8x8xf32>
    %35 = vector.shape_cast %32 : vector<8x8xf32> to vector<1x8x8xf32>
    tpu.vector_store %arg18[%c0_35, %c0_36, %c0_37], %35 {strides = array<i32>} : memref<4x8x8xf32, #tpu.memory_space<vmem>>, vector<1x8x8xf32>,
    %c1 = arith.constant 1 : index
    %c0_38 = arith.constant 0 : index
    %c0_39 = arith.constant 0 : index
    %36 = vector.load %arg16[%c1, %c0_38, %c0_39] : memref<4x8x8xf32, #tpu.memory_space<vmem>>, vector<1x8x8xf32>
    %37 = vector.shape_cast %36 : vector<1x8x8xf32> to vector<8x8xf32>
    %c1_40 = arith.constant 1 : index
    %c0_41 = arith.constant 0 : index
    %c0_42 = arith.constant 0 : index
    %38 = vector.load %arg7[%c1_40, %c0_41, %c0_42] : memref<4x32x8xf32, #tpu.memory_space<vmem>>, vector<1x32x8xf32>
    %39 = vector.shape_cast %38 : vector<1x32x8xf32> to vector<32x8xf32>
    %cst_43 = arith.constant dense<0.000000e+00> : vector<8x8xf32>
    %40 = tpu.matmul %4, %39, %cst_43 {dimension_numbers = #tpu.dot_dimension_numbers<[1], [0], [0], [1], [0, 0, 1, 1], [], []>} : vector<8x32xf32>, vector<32x8xf32>, vector<8x8xf32> -> vector<8x8xf32>
    %41 = arith.addf %37, %40 : vector<8x8xf32>
    %c1_44 = arith.constant 1 : index
    %c0_45 = arith.constant 0 : index
    %c0_46 = arith.constant 0 : index
    %42 = vector.load %arg16[%c1_44, %c0_45, %c0_46] : memref<4x8x8xf32, #tpu.memory_space<vmem>>, vector<1x8x8xf32>
    %43 = vector.shape_cast %42 : vector<1x8x8xf32> to vector<8x8xf32>
    %44 = vector.shape_cast %41 : vector<8x8xf32> to vector<1x8x8xf32>
    tpu.vector_store %arg16[%c1_44, %c0_45, %c0_46], %44 {strides = array<i32>} : memref<4x8x8xf32, #tpu.memory_space<vmem>>, vector<1x8x8xf32>,
    %c1_47 = arith.constant 1 : index
    %c0_48 = arith.constant 0 : index
    %c0_49 = arith.constant 0 : index
    %45 = vector.load %arg17[%c1_47, %c0_48, %c0_49] : memref<4x8x8xf32, #tpu.memory_space<vmem>>, vector<1x8x8xf32>
    %46 = vector.shape_cast %45 : vector<1x8x8xf32> to vector<8x8xf32>
    %c1_50 = arith.constant 1 : index
    %c0_51 = arith.constant 0 : index
    %c0_52 = arith.constant 0 : index
    %47 = vector.load %arg8[%c1_50, %c0_51, %c0_52] : memref<4x32x8xf32, #tpu.memory_space<vmem>>, vector<1x32x8xf32>
    %48 = vector.shape_cast %47 : vector<1x32x8xf32> to vector<32x8xf32>
    %cst_53 = arith.constant dense<0.000000e+00> : vector<8x8xf32>
    %49 = tpu.matmul %6, %48, %cst_53 {dimension_numbers = #tpu.dot_dimension_numbers<[1], [0], [0], [1], [0, 0, 1, 1], [], []>} : vector<8x32xf32>, vector<32x8xf32>, vector<8x8xf32> -> vector<8x8xf32>
    %50 = arith.addf %46, %49 : vector<8x8xf32>
    %c1_54 = arith.constant 1 : index
    %c0_55 = arith.constant 0 : index
    %c0_56 = arith.constant 0 : index
    %51 = vector.load %arg17[%c1_54, %c0_55, %c0_56] : memref<4x8x8xf32, #tpu.memory_space<vmem>>, vector<1x8x8xf32>
    %52 = vector.shape_cast %51 : vector<1x8x8xf32> to vector<8x8xf32>
    %53 = vector.shape_cast %50 : vector<8x8xf32> to vector<1x8x8xf32>
    tpu.vector_store %arg17[%c1_54, %c0_55, %c0_56], %53 {strides = array<i32>} : memref<4x8x8xf32, #tpu.memory_space<vmem>>, vector<1x8x8xf32>,
    %c1_57 = arith.constant 1 : index
    %c0_58 = arith.constant 0 : index
    %c0_59 = arith.constant 0 : index
    %54 = vector.load %arg18[%c1_57, %c0_58, %c0_59] : memref<4x8x8xf32, #tpu.memory_space<vmem>>, vector<1x8x8xf32>
    %55 = vector.shape_cast %54 : vector<1x8x8xf32> to vector<8x8xf32>
    %c1_60 = arith.constant 1 : index
    %c0_61 = arith.constant 0 : index
    %c0_62 = arith.constant 0 : index
    %56 = vector.load %arg9[%c1_60, %c0_61, %c0_62] : memref<4x32x8xf32, #tpu.memory_space<vmem>>, vector<1x32x8xf32>
    %57 = vector.shape_cast %56 : vector<1x32x8xf32> to vector<32x8xf32>
    %cst_63 = arith.constant dense<0.000000e+00> : vector<8x8xf32>
    %58 = tpu.matmul %8, %57, %cst_63 {dimension_numbers = #tpu.dot_dimension_numbers<[1], [0], [0], [1], [0, 0, 1, 1], [], []>} : vector<8x32xf32>, vector<32x8xf32>, vector<8x8xf32> -> vector<8x8xf32>
    %59 = arith.addf %55, %58 : vector<8x8xf32>
    %c1_64 = arith.constant 1 : index
    %c0_65 = arith.constant 0 : index
    %c0_66 = arith.constant 0 : index
    %60 = vector.load %arg18[%c1_64, %c0_65, %c0_66] : memref<4x8x8xf32, #tpu.memory_space<vmem>>, vector<1x8x8xf32>
    %61 = vector.shape_cast %60 : vector<1x8x8xf32> to vector<8x8xf32>
    %62 = vector.shape_cast %59 : vector<8x8xf32> to vector<1x8x8xf32>
    tpu.vector_store %arg18[%c1_64, %c0_65, %c0_66], %62 {strides = array<i32>} : memref<4x8x8xf32, #tpu.memory_space<vmem>>, vector<1x8x8xf32>,
    %c2 = arith.constant 2 : index
    %c0_67 = arith.constant 0 : index
    %c0_68 = arith.constant 0 : index
    %63 = vector.load %arg16[%c2, %c0_67, %c0_68] : memref<4x8x8xf32, #tpu.memory_space<vmem>>, vector<1x8x8xf32>
    %64 = vector.shape_cast %63 : vector<1x8x8xf32> to vector<8x8xf32>
    %c2_69 = arith.constant 2 : index
    %c0_70 = arith.constant 0 : index
    %c0_71 = arith.constant 0 : index
    %65 = vector.load %arg7[%c2_69, %c0_70, %c0_71] : memref<4x32x8xf32, #tpu.memory_space<vmem>>, vector<1x32x8xf32>
    %66 = vector.shape_cast %65 : vector<1x32x8xf32> to vector<32x8xf32>
    %cst_72 = arith.constant dense<0.000000e+00> : vector<8x8xf32>
    %67 = tpu.matmul %4, %66, %cst_72 {dimension_numbers = #tpu.dot_dimension_numbers<[1], [0], [0], [1], [0, 0, 1, 1], [], []>} : vector<8x32xf32>, vector<32x8xf32>, vector<8x8xf32> -> vector<8x8xf32>
    %68 = arith.addf %64, %67 : vector<8x8xf32>
    %c2_73 = arith.constant 2 : index
    %c0_74 = arith.constant 0 : index
    %c0_75 = arith.constant 0 : index
    %69 = vector.load %arg16[%c2_73, %c0_74, %c0_75] : memref<4x8x8xf32, #tpu.memory_space<vmem>>, vector<1x8x8xf32>
    %70 = vector.shape_cast %69 : vector<1x8x8xf32> to vector<8x8xf32>
    %71 = vector.shape_cast %68 : vector<8x8xf32> to vector<1x8x8xf32>
    tpu.vector_store %arg16[%c2_73, %c0_74, %c0_75], %71 {strides = array<i32>} : memref<4x8x8xf32, #tpu.memory_space<vmem>>, vector<1x8x8xf32>,
    %c2_76 = arith.constant 2 : index
    %c0_77 = arith.constant 0 : index
    %c0_78 = arith.constant 0 : index
    %72 = vector.load %arg17[%c2_76, %c0_77, %c0_78] : memref<4x8x8xf32, #tpu.memory_space<vmem>>, vector<1x8x8xf32>
    %73 = vector.shape_cast %72 : vector<1x8x8xf32> to vector<8x8xf32>
    %c2_79 = arith.constant 2 : index
    %c0_80 = arith.constant 0 : index
    %c0_81 = arith.constant 0 : index
    %74 = vector.load %arg8[%c2_79, %c0_80, %c0_81] : memref<4x32x8xf32, #tpu.memory_space<vmem>>, vector<1x32x8xf32>
    %75 = vector.shape_cast %74 : vector<1x32x8xf32> to vector<32x8xf32>
    %cst_82 = arith.constant dense<0.000000e+00> : vector<8x8xf32>
    %76 = tpu.matmul %6, %75, %cst_82 {dimension_numbers = #tpu.dot_dimension_numbers<[1], [0], [0], [1], [0, 0, 1, 1], [], []>} : vector<8x32xf32>, vector<32x8xf32>, vector<8x8xf32> -> vector<8x8xf32>
    %77 = arith.addf %73, %76 : vector<8x8xf32>
    %c2_83 = arith.constant 2 : index
    %c0_84 = arith.constant 0 : index
    %c0_85 = arith.constant 0 : index
    %78 = vector.load %arg17[%c2_83, %c0_84, %c0_85] : memref<4x8x8xf32, #tpu.memory_space<vmem>>, vector<1x8x8xf32>
    %79 = vector.shape_cast %78 : vector<1x8x8xf32> to vector<8x8xf32>
    %80 = vector.shape_cast %77 : vector<8x8xf32> to vector<1x8x8xf32>
    tpu.vector_store %arg17[%c2_83, %c0_84, %c0_85], %80 {strides = array<i32>} : memref<4x8x8xf32, #tpu.memory_space<vmem>>, vector<1x8x8xf32>,
    %c2_86 = arith.constant 2 : index
    %c0_87 = arith.constant 0 : index
    %c0_88 = arith.constant 0 : index
    %81 = vector.load %arg18[%c2_86, %c0_87, %c0_88] : memref<4x8x8xf32, #tpu.memory_space<vmem>>, vector<1x8x8xf32>
    %82 = vector.shape_cast %81 : vector<1x8x8xf32> to vector<8x8xf32>
    %c2_89 = arith.constant 2 : index
    %c0_90 = arith.constant 0 : index
    %c0_91 = arith.constant 0 : index
    %83 = vector.load %arg9[%c2_89, %c0_90, %c0_91] : memref<4x32x8xf32, #tpu.memory_space<vmem>>, vector<1x32x8xf32>
    %84 = vector.shape_cast %83 : vector<1x32x8xf32> to vector<32x8xf32>
    %cst_92 = arith.constant dense<0.000000e+00> : vector<8x8xf32>
    %85 = tpu.matmul %8, %84, %cst_92 {dimension_numbers = #tpu.dot_dimension_numbers<[1], [0], [0], [1], [0, 0, 1, 1], [], []>} : vector<8x32xf32>, vector<32x8xf32>, vector<8x8xf32> -> vector<8x8xf32>
    %86 = arith.addf %82, %85 : vector<8x8xf32>
    %c2_93 = arith.constant 2 : index
    %c0_94 = arith.constant 0 : index
    %c0_95 = arith.constant 0 : index
    %87 = vector.load %arg18[%c2_93, %c0_94, %c0_95] : memref<4x8x8xf32, #tpu.memory_space<vmem>>, vector<1x8x8xf32>
    %88 = vector.shape_cast %87 : vector<1x8x8xf32> to vector<8x8xf32>
    %89 = vector.shape_cast %86 : vector<8x8xf32> to vector<1x8x8xf32>
    tpu.vector_store %arg18[%c2_93, %c0_94, %c0_95], %89 {strides = array<i32>} : memref<4x8x8xf32, #tpu.memory_space<vmem>>, vector<1x8x8xf32>,
    %c3 = arith.constant 3 : index
    %c0_96 = arith.constant 0 : index
    %c0_97 = arith.constant 0 : index
    %90 = vector.load %arg16[%c3, %c0_96, %c0_97] : memref<4x8x8xf32, #tpu.memory_space<vmem>>, vector<1x8x8xf32>
    %91 = vector.shape_cast %90 : vector<1x8x8xf32> to vector<8x8xf32>
    %c3_98 = arith.constant 3 : index
    %c0_99 = arith.constant 0 : index
    %c0_100 = arith.constant 0 : index
    %92 = vector.load %arg7[%c3_98, %c0_99, %c0_100] : memref<4x32x8xf32, #tpu.memory_space<vmem>>, vector<1x32x8xf32>
    %93 = vector.shape_cast %92 : vector<1x32x8xf32> to vector<32x8xf32>
    %cst_101 = arith.constant dense<0.000000e+00> : vector<8x8xf32>
    %94 = tpu.matmul %4, %93, %cst_101 {dimension_numbers = #tpu.dot_dimension_numbers<[1], [0], [0], [1], [0, 0, 1, 1], [], []>} : vector<8x32xf32>, vector<32x8xf32>, vector<8x8xf32> -> vector<8x8xf32>
    %95 = arith.addf %91, %94 : vector<8x8xf32>
    %c3_102 = arith.constant 3 : index
    %c0_103 = arith.constant 0 : index
    %c0_104 = arith.constant 0 : index
    %96 = vector.load %arg16[%c3_102, %c0_103, %c0_104] : memref<4x8x8xf32, #tpu.memory_space<vmem>>, vector<1x8x8xf32>
    %97 = vector.shape_cast %96 : vector<1x8x8xf32> to vector<8x8xf32>
    %98 = vector.shape_cast %95 : vector<8x8xf32> to vector<1x8x8xf32>
    tpu.vector_store %arg16[%c3_102, %c0_103, %c0_104], %98 {strides = array<i32>} : memref<4x8x8xf32, #tpu.memory_space<vmem>>, vector<1x8x8xf32>,
    %c3_105 = arith.constant 3 : index
    %c0_106 = arith.constant 0 : index
    %c0_107 = arith.constant 0 : index
    %99 = vector.load %arg17[%c3_105, %c0_106, %c0_107] : memref<4x8x8xf32, #tpu.memory_space<vmem>>, vector<1x8x8xf32>
    %100 = vector.shape_cast %99 : vector<1x8x8xf32> to vector<8x8xf32>
    %c3_108 = arith.constant 3 : index
    %c0_109 = arith.constant 0 : index
    %c0_110 = arith.constant 0 : index
    %101 = vector.load %arg8[%c3_108, %c0_109, %c0_110] : memref<4x32x8xf32, #tpu.memory_space<vmem>>, vector<1x32x8xf32>
    %102 = vector.shape_cast %101 : vector<1x32x8xf32> to vector<32x8xf32>
    %cst_111 = arith.constant dense<0.000000e+00> : vector<8x8xf32>
    %103 = tpu.matmul %6, %102, %cst_111 {dimension_numbers = #tpu.dot_dimension_numbers<[1], [0], [0], [1], [0, 0, 1, 1], [], []>} : vector<8x32xf32>, vector<32x8xf32>, vector<8x8xf32> -> vector<8x8xf32>
    %104 = arith.addf %100, %103 : vector<8x8xf32>
    %c3_112 = arith.constant 3 : index
    %c0_113 = arith.constant 0 : index
    %c0_114 = arith.constant 0 : index
    %105 = vector.load %arg17[%c3_112, %c0_113, %c0_114] : memref<4x8x8xf32, #tpu.memory_space<vmem>>, vector<1x8x8xf32>
    %106 = vector.shape_cast %105 : vector<1x8x8xf32> to vector<8x8xf32>
    %107 = vector.shape_cast %104 : vector<8x8xf32> to vector<1x8x8xf32>
    tpu.vector_store %arg17[%c3_112, %c0_113, %c0_114], %107 {strides = array<i32>} : memref<4x8x8xf32, #tpu.memory_space<vmem>>, vector<1x8x8xf32>,
    %c3_115 = arith.constant 3 : index
    %c0_116 = arith.constant 0 : index
    %c0_117 = arith.constant 0 : index
    %108 = vector.load %arg18[%c3_115, %c0_116, %c0_117] : memref<4x8x8xf32, #tpu.memory_space<vmem>>, vector<1x8x8xf32>
    %109 = vector.shape_cast %108 : vector<1x8x8xf32> to vector<8x8xf32>
    %c3_118 = arith.constant 3 : index
    %c0_119 = arith.constant 0 : index
    %c0_120 = arith.constant 0 : index
    %110 = vector.load %arg9[%c3_118, %c0_119, %c0_120] : memref<4x32x8xf32, #tpu.memory_space<vmem>>, vector<1x32x8xf32>
    %111 = vector.shape_cast %110 : vector<1x32x8xf32> to vector<32x8xf32>
    %cst_121 = arith.constant dense<0.000000e+00> : vector<8x8xf32>
    %112 = tpu.matmul %8, %111, %cst_121 {dimension_numbers = #tpu.dot_dimension_numbers<[1], [0], [0], [1], [0, 0, 1, 1], [], []>} : vector<8x32xf32>, vector<32x8xf32>, vector<8x8xf32> -> vector<8x8xf32>
    %113 = arith.addf %109, %112 : vector<8x8xf32>
    %c3_122 = arith.constant 3 : index
    %c0_123 = arith.constant 0 : index
    %c0_124 = arith.constant 0 : index
    %114 = vector.load %arg18[%c3_122, %c0_123, %c0_124] : memref<4x8x8xf32, #tpu.memory_space<vmem>>, vector<1x8x8xf32>
    %115 = vector.shape_cast %114 : vector<1x8x8xf32> to vector<8x8xf32>
    %116 = vector.shape_cast %113 : vector<8x8xf32> to vector<1x8x8xf32>
    tpu.vector_store %arg18[%c3_122, %c0_123, %c0_124], %116 {strides = array<i32>} : memref<4x8x8xf32, #tpu.memory_space<vmem>>, vector<1x8x8xf32>,
    %c0_i32_125 = arith.constant 0 : i32
    %117 = arith.cmpi eq, %arg3, %c0_i32_125 : i32
    %118 = arith.extui %117 : i1 to i32
    %c0_i32_126 = arith.constant 0 : i32
    %119 = arith.cmpi ne, %118, %c0_i32_126 : i32
    scf.if %119 {
      %c0_127 = arith.constant 0 : index
      %c0_128 = arith.constant 0 : index
      %c0_129 = arith.constant 0 : index
      %120 = vector.load %arg16[%c0_127, %c0_128, %c0_129] : memref<4x8x8xf32, #tpu.memory_space<vmem>>, vector<4x8x8xf32>
      %c0_130 = arith.constant 0 : index
      %c0_131 = arith.constant 0 : index
      %c0_132 = arith.constant 0 : index
      %121 = vector.load %arg10[%c0_130, %c0_131, %c0_132] : memref<4x1x8xf32, #tpu.memory_space<vmem>>, vector<4x1x8xf32>
      %122 = vector.broadcast %121 : vector<4x1x8xf32> to vector<4x8x8xf32>
      %123 = arith.addf %120, %122 : vector<4x8x8xf32>
      %c0_133 = arith.constant 0 : index
      %c0_134 = arith.constant 0 : index
      %c0_135 = arith.constant 0 : index
      %c0_136 = arith.constant 0 : index
      %124 = vector.load %arg13[%c0_133, %c0_134, %c0_135, %c0_136] : memref<1x4x8x8xf32, #tpu.memory_space<vmem>>, vector<1x4x8x8xf32>
      %125 = vector.shape_cast %124 : vector<1x4x8x8xf32> to vector<4x8x8xf32>
      %126 = vector.shape_cast %123 : vector<4x8x8xf32> to vector<1x4x8x8xf32>
      tpu.vector_store %arg13[%c0_133, %c0_134, %c0_135, %c0_136], %126 {strides = array<i32>} : memref<1x4x8x8xf32, #tpu.memory_space<vmem>>, vector<1x4x8x8xf32>,
      %c0_137 = arith.constant 0 : index
      %c0_138 = arith.constant 0 : index
      %c0_139 = arith.constant 0 : index
      %127 = vector.load %arg17[%c0_137, %c0_138, %c0_139] : memref<4x8x8xf32, #tpu.memory_space<vmem>>, vector<4x8x8xf32>
      %c0_140 = arith.constant 0 : index
      %c0_141 = arith.constant 0 : index
      %c0_142 = arith.constant 0 : index
      %128 = vector.load %arg11[%c0_140, %c0_141, %c0_142] : memref<4x1x8xf32, #tpu.memory_space<vmem>>, vector<4x1x8xf32>
      %129 = vector.broadcast %128 : vector<4x1x8xf32> to vector<4x8x8xf32>
      %130 = arith.addf %127, %129 : vector<4x8x8xf32>
      %c0_143 = arith.constant 0 : index
      %c0_144 = arith.constant 0 : index
      %c0_145 = arith.constant 0 : index
      %c0_146 = arith.constant 0 : index
      %131 = vector.load %arg14[%c0_143, %c0_144, %c0_145, %c0_146] : memref<1x4x8x8xf32, #tpu.memory_space<vmem>>, vector<1x4x8x8xf32>
      %132 = vector.shape_cast %131 : vector<1x4x8x8xf32> to vector<4x8x8xf32>
      %133 = vector.shape_cast %130 : vector<4x8x8xf32> to vector<1x4x8x8xf32>
      tpu.vector_store %arg14[%c0_143, %c0_144, %c0_145, %c0_146], %133 {strides = array<i32>} : memref<1x4x8x8xf32, #tpu.memory_space<vmem>>, vector<1x4x8x8xf32>,
      %c0_147 = arith.constant 0 : index
      %c0_148 = arith.constant 0 : index
      %c0_149 = arith.constant 0 : index
      %134 = vector.load %arg18[%c0_147, %c0_148, %c0_149] : memref<4x8x8xf32, #tpu.memory_space<vmem>>, vector<4x8x8xf32>
      %c0_150 = arith.constant 0 : index
      %c0_151 = arith.constant 0 : index
      %c0_152 = arith.constant 0 : index
      %135 = vector.load %arg12[%c0_150, %c0_151, %c0_152] : memref<4x1x8xf32, #tpu.memory_space<vmem>>, vector<4x1x8xf32>
      %136 = vector.broadcast %135 : vector<4x1x8xf32> to vector<4x8x8xf32>
      %137 = arith.addf %134, %136 : vector<4x8x8xf32>
      %c0_153 = arith.constant 0 : index
      %c0_154 = arith.constant 0 : index
      %c0_155 = arith.constant 0 : index
      %c0_156 = arith.constant 0 : index
      %138 = vector.load %arg15[%c0_153, %c0_154, %c0_155, %c0_156] : memref<1x4x8x8xf32, #tpu.memory_space<vmem>>, vector<1x4x8x8xf32>
      %139 = vector.shape_cast %138 : vector<1x4x8x8xf32> to vector<4x8x8xf32>
      %140 = vector.shape_cast %137 : vector<4x8x8xf32> to vector<1x4x8x8xf32>
      tpu.vector_store %arg15[%c0_153, %c0_154, %c0_155, %c0_156], %140 {strides = array<i32>} : memref<1x4x8x8xf32, #tpu.memory_space<vmem>>, vector<1x4x8x8xf32>,
    } else {
    }
    return
  }
  func.func @transform_0(%arg0: i32, %arg1: i32, %arg2: i32, %arg3: i32) -> (i32, i32, i32) {
    %c0_i32 = arith.constant 0 : i32
    return %arg0, %arg1, %arg3 : i32, i32, i32
  }
  func.func @transform_1(%arg0: i32, %arg1: i32, %arg2: i32, %arg3: i32) -> (i32, i32, i32) {
    %c0_i32 = arith.constant 0 : i32
    return %arg0, %arg1, %arg3 : i32, i32, i32
  }
  func.func @transform_2(%arg0: i32, %arg1: i32, %arg2: i32, %arg3: i32) -> (i32, i32, i32) {
    %c0_i32 = arith.constant 0 : i32
    return %arg0, %arg1, %arg3 : i32, i32, i32
  }
  func.func @transform_3(%arg0: i32, %arg1: i32, %arg2: i32, %arg3: i32) -> (i32, i32, i32) {
    %c0_i32 = arith.constant 0 : i32
    %c0_i32_0 = arith.constant 0 : i32
    return %arg2, %arg3, %c0_i32 : i32, i32, i32
  }
  func.func @transform_4(%arg0: i32, %arg1: i32, %arg2: i32, %arg3: i32) -> (i32, i32, i32) {
    %c0_i32 = arith.constant 0 : i32
    %c0_i32_0 = arith.constant 0 : i32
    return %arg2, %arg3, %c0_i32 : i32, i32, i32
  }
  func.func @transform_5(%arg0: i32, %arg1: i32, %arg2: i32, %arg3: i32) -> (i32, i32, i32) {
    %c0_i32 = arith.constant 0 : i32
    %c0_i32_0 = arith.constant 0 : i32
    return %arg2, %arg3, %c0_i32 : i32, i32, i32
  }
  func.func @transform_6(%arg0: i32, %arg1: i32, %arg2: i32, %arg3: i32) -> (i32, i32, i32) {
    %c0_i32 = arith.constant 0 : i32
    %c0_i32_0 = arith.constant 0 : i32
    %c0_i32_1 = arith.constant 0 : i32
    return %arg2, %c0_i32, %c0_i32_0 : i32, i32, i32
  }
  func.func @transform_7(%arg0: i32, %arg1: i32, %arg2: i32, %arg3: i32) -> (i32, i32, i32) {
    %c0_i32 = arith.constant 0 : i32
    %c0_i32_0 = arith.constant 0 : i32
    %c0_i32_1 = arith.constant 0 : i32
    return %arg2, %c0_i32, %c0_i32_0 : i32, i32, i32
  }
  func.func @transform_8(%arg0: i32, %arg1: i32, %arg2: i32, %arg3: i32) -> (i32, i32, i32) {
    %c0_i32 = arith.constant 0 : i32
    %c0_i32_0 = arith.constant 0 : i32
    %c0_i32_1 = arith.constant 0 : i32
    return %arg2, %c0_i32, %c0_i32_0 : i32, i32, i32
  }
  func.func @transform_9(%arg0: i32, %arg1: i32, %arg2: i32, %arg3: i32) -> (i32, i32, i32, i32) {
    %c0_i32 = arith.constant 0 : i32
    %c0_i32_0 = arith.constant 0 : i32
    return %arg0, %arg2, %arg1, %c0_i32 : i32, i32, i32, i32
  }
  func.func @transform_10(%arg0: i32, %arg1: i32, %arg2: i32, %arg3: i32) -> (i32, i32, i32, i32) {
    %c0_i32 = arith.constant 0 : i32
    %c0_i32_0 = arith.constant 0 : i32
    return %arg0, %arg2, %arg1, %c0_i32 : i32, i32, i32, i32
  }
  func.func @transform_11(%arg0: i32, %arg1: i32, %arg2: i32, %arg3: i32) -> (i32, i32, i32, i32) {
    %c0_i32 = arith.constant 0 : i32
    %c0_i32_0 = arith.constant 0 : i32
    return %arg0, %arg2, %arg1, %c0_i32 : i32, i32, i32, i32
  }
}

</mosaic_0001>

<llo_original>
// kernel: tpu_custom_call.1
$region0: #{tpu_custom_call.1}
  #allocation0 [shape = 'u32[]', space=smem, size = 0x4, offset = 0x4, fixed_abs, tag = 'smem constant byte address 0x4 - core index']
  #allocation1 [shape = 'u32[144,128]{1,0:T(1,128)}', space=vmem, size = 0x12000, scoped, tag = 'internal scratch']
  #allocation2 [shape = 'f32[4,8,8]{2,1,0:T(8,128)}', space=vmem, size = 0x4000, scoped, tag = 'scratch operand']
  #allocation3 [shape = 'f32[4,8,8]{2,1,0:T(8,128)}', space=vmem, size = 0x4000, scoped, tag = 'scratch operand']
  #allocation4 [shape = 'f32[4,8,8]{2,1,0:T(8,128)}', space=vmem, size = 0x4000, scoped, tag = 'scratch operand']
  %s0 = inlined_call_operand.vmem [shape: f32[2,8,32], index: 0, kind: input, shape index: {}]
  %s1 = inlined_call_operand.vmem [shape: f32[2,8,32], index: 1, kind: input, shape index: {}]
  %s2 = inlined_call_operand.vmem [shape: f32[2,8,32], index: 2, kind: input, shape index: {}]
  %s3 = inlined_call_operand.vmem [shape: f32[4,32,8], index: 3, kind: input, shape index: {}]
  %s4 = inlined_call_operand.vmem [shape: f32[4,32,8], index: 4, kind: input, shape index: {}]
  %s5 = inlined_call_operand.vmem [shape: f32[4,32,8], index: 5, kind: input, shape index: {}]
  %s6 = inlined_call_operand.vmem [shape: f32[4,1,8], index: 6, kind: input, shape index: {}]
  %s7 = inlined_call_operand.vmem [shape: f32[4,1,8], index: 7, kind: input, shape index: {}]
  %s8 = inlined_call_operand.vmem [shape: f32[4,1,8], index: 8, kind: input, shape index: {}]
  %s9 = inlined_call_operand.hbm [shape: f32[2,4,8,8], index: 9, kind: output, shape index: {0}]
  %s10 = inlined_call_operand.hbm [shape: f32[2,4,8,8], index: 10, kind: output, shape index: {1}]
  %s11 = inlined_call_operand.hbm [shape: f32[2,4,8,8], index: 11, kind: output, shape index: {2}]
  %12 = xla_tuple %s9, %s10, %s11
  %s13 = sld [smem:[#allocation0]]
  $region93: #{tpu_custom_call.1} parent=0
    _
  %s15 = ssub.s32 1, %s13
  %s16 = scalar_select 0, %s15, %s13
  $region1: #{tpu_custom_call.1} parent=0
    #allocation5 [shape = 'u8[32768]{0}', space=vmem, size = 0x8000, scoped, tag = 'output window, operand 0']
    #allocation6 [shape = 's32[2]{0}', space=sflag, size = 0x8, scoped, tag = 'scoped memory for tpu_custom_call.1']
    #allocation7 [shape = 'u8[32768]{0}', space=vmem, size = 0x8000, scoped, tag = 'output window, operand 1']
    #allocation8 [shape = 's32[2]{0}', space=sflag, size = 0x8, scoped, tag = 'scoped memory for tpu_custom_call.1']
    #allocation9 [shape = 'u8[32768]{0}', space=vmem, size = 0x8000, scoped, tag = 'output window, operand 2']
    %17 = vsyncpa [#allocation6], 0
    %s18 = scalar_lea.sflag [#allocation6], 1
    %19 = vsyncpa %s18, 0
    %20 = vsyncpa [#allocation8], 0
    %s21 = scalar_lea.sflag [#allocation8], 1
    %22 = vsyncpa %s21, 0
    loop: start=0, step=1, limit=4
    $region2: #{tpu_custom_call.1} parent=1 // loop_pre_header
      _
    $region3: #{tpu_custom_call.1} parent=1 // loop_header
      %s24 = sphi 0, %s28
      %p25 = scmp.ge.s32.totalorder %s24, 4
      %s31 = sphi 0, %s57
      %s32 = sphi 0, %s53
      %s33 = sphi 0, %s49
      %s34 = sphi 0, %s45
      %s35 = sphi 0, %s31
      %s36 = sphi 0, %s32
      %s37 = sphi 0, %s33
      %s38 = sphi 0, %s34
      %s39 = sphi 0, %s35
      %s40 = sphi 0, %s36
      %s41 = sphi 0, %s37
      %s42 = sphi 0, %s38
      %s64 = sphi 0, %s66
      %s67 = sphi 0, %s64
      %s68 = sphi 0, %s67
      %s84 = sphi 0, %s68
      %s94 = sphi 0, %s96
      %s97 = sphi 0, %s94
      %s98 = sphi 0, %s97
      %s114 = sphi 0, %s98
      %s124 = sphi 0, %s126
      %s127 = sphi 0, %s124
      %s128 = sphi 0, %s127
      %s144 = sphi 0, %s128
      %s152 = sphi 0, %s154
      %s155 = sphi 0, %s152
      %s156 = sphi 0, %s155
      %s172 = sphi 0, %s156
      %s180 = sphi 0, %s182
      %s183 = sphi 0, %s180
      %s184 = sphi 0, %s183
      %s200 = sphi 0, %s184
      %s208 = sphi 0, %s210
      %s211 = sphi 0, %s208
      %s212 = sphi 0, %s211
      %s228 = sphi 0, %s212
      %s234 = sphi 0, %s236
      %s237 = sphi 0, %s234
      %s238 = sphi 0, %s237
      %s254 = sphi 0, %s238
      %s260 = sphi 0, %s262
      %s263 = sphi 0, %s260
      %s264 = sphi 0, %s263
      %s280 = sphi 0, %s264
      %s286 = sphi 0, %s288
      %s289 = sphi 0, %s286
      %s290 = sphi 0, %s289
      %s306 = sphi 0, %s290
      %s316 = sphi 0, %s318
      %s319 = sphi 0, %s316
      %s320 = sphi 0, %s319
      %s336 = sphi 0, %s320
      %s346 = sphi 0, %s348
      %s349 = sphi 0, %s346
      %s350 = sphi 0, %s349
      %s366 = sphi 0, %s350
      %s376 = sphi 0, %s378
      %s379 = sphi 0, %s376
      %s380 = sphi 0, %s379
      %s396 = sphi 0, %s380
    $region4: #{tpu_custom_call.1} parent=1 // loop_header_branch
      %27 = sbr.rel (%p25) target = $region8
    $region5: #{tpu_custom_call.1} parent=1 // loop_body
      %s29 = ssub.s32 %s24, 1
      %s30 = ssub.s32 %s24, 2
      %s43 = sadd.s32 1, %s34
      %p44 = scmp.ge.s32.totalorder %s43, 1
      %s45 = scalar_select %p44, 0, %s43
      %s46 = sadd.s32 1, %s33
      %s47 = scalar_select %p44, %s46, %s33
      %p48 = scmp.ge.s32.totalorder %s47, 1
      %s49 = scalar_select %p48, 0, %s47
      %s50 = sadd.s32 1, %s32
      %s51 = scalar_select %p48, %s50, %s32
      %p52 = scmp.ge.s32.totalorder %s51, 1
      %s53 = scalar_select %p52, 0, %s51
      %s54 = sadd.s32 1, %s31
      %s55 = scalar_select %p52, %s54, %s31
      %p56 = scmp.ge.s32.totalorder %s55, 2
      %s57 = scalar_select %p56, 0, %s55
      %s58 = ssub.s32 %s31, %s57
      %s59 = ssub.s32 %s32, %s53
      %s60 = sor.u32 %s58, %s59
      %s61 = ssub.s32 %s34, %s45
      %s62 = sor.u32 %s60, %s61
      %p63 = scmp.eq.s32.totalorder %s62, 0
      %s65 = sadd.s32 %s64, 1
      %s66 = scalar_select %p63, %s64, %s65
      %p69 = pneg %p63
      %p70 = scmp.eq.s32.totalorder %s24, 1
      %p71 = por %p69, %p70
      %p72 = scmp.ne.s32.totalorder %s64, %s67
      %p73 = scmp.eq.s32.totalorder %s24, 0
      %p74 = por %p72, %p73
      %p75 = scmp.ne.s32.totalorder %s64, %s67
      %p76 = scmp.eq.s32.totalorder %s29, 1
      %p77 = por %p75, %p76
      %p78 = scmp.ne.s32.totalorder %s67, %s68
      %p79 = scmp.eq.s32.totalorder %s29, 0
      %p80 = por %p78, %p79
      %p81 = scmp.ne.s32.totalorder %s67, %s68
      %p82 = scmp.eq.s32.totalorder %s30, 1
      %p83 = por %p81, %p82
      %p85 = scmp.ne.s32.totalorder %s68, %s84
      %p86 = scmp.eq.s32.totalorder %s30, 0
      %p87 = por %p85, %p86
      %s88 = ssub.s32 %s31, %s57
      %s89 = ssub.s32 %s32, %s53
      %s90 = sor.u32 %s88, %s89
      %s91 = ssub.s32 %s34, %s45
      %s92 = sor.u32 %s90, %s91
      %p93 = scmp.eq.s32.totalorder %s92, 0
      %s95 = sadd.s32 %s94, 1
      %s96 = scalar_select %p93, %s94, %s95
      %p99 = pneg %p93
      %p100 = scmp.eq.s32.totalorder %s24, 1
      %p101 = por %p99, %p100
      %p102 = scmp.ne.s32.totalorder %s94, %s97
      %p103 = scmp.eq.s32.totalorder %s24, 0
      %p104 = por %p102, %p103
      %p105 = scmp.ne.s32.totalorder %s94, %s97
      %p106 = scmp.eq.s32.totalorder %s29, 1
      %p107 = por %p105, %p106
      %p108 = scmp.ne.s32.totalorder %s97, %s98
      %p109 = scmp.eq.s32.totalorder %s29, 0
      %p110 = por %p108, %p109
      %p111 = scmp.ne.s32.totalorder %s97, %s98
      %p112 = scmp.eq.s32.totalorder %s30, 1
      %p113 = por %p111, %p112
      %p115 = scmp.ne.s32.totalorder %s98, %s114
      %p116 = scmp.eq.s32.totalorder %s30, 0
      %p117 = por %p115, %p116
      %s118 = ssub.s32 %s31, %s57
      %s119 = ssub.s32 %s32, %s53
      %s120 = sor.u32 %s118, %s119
      %s121 = ssub.s32 %s34, %s45
      %s122 = sor.u32 %s120, %s121
      %p123 = scmp.eq.s32.totalorder %s122, 0
      %s125 = sadd.s32 %s124, 1
      %s126 = scalar_select %p123, %s124, %s125
      %p129 = pneg %p123
      %p130 = scmp.eq.s32.totalorder %s24, 1
      %p131 = por %p129, %p130
      %p132 = scmp.ne.s32.totalorder %s124, %s127
      %p133 = scmp.eq.s32.totalorder %s24, 0
      %p134 = por %p132, %p133
      %p135 = scmp.ne.s32.totalorder %s124, %s127
      %p136 = scmp.eq.s32.totalorder %s29, 1
      %p137 = por %p135, %p136
      %p138 = scmp.ne.s32.totalorder %s127, %s128
      %p139 = scmp.eq.s32.totalorder %s29, 0
      %p140 = por %p138, %p139
      %p141 = scmp.ne.s32.totalorder %s127, %s128
      %p142 = scmp.eq.s32.totalorder %s30, 1
      %p143 = por %p141, %p142
      %p145 = scmp.ne.s32.totalorder %s128, %s144
      %p146 = scmp.eq.s32.totalorder %s30, 0
      %p147 = por %p145, %p146
      %s148 = ssub.s32 %s33, %s49
      %s149 = ssub.s32 %s34, %s45
      %s150 = sor.u32 %s148, %s149
      %p151 = scmp.eq.s32.totalorder %s150, 0
      %s153 = sadd.s32 %s152, 1
      %s154 = scalar_select %p151, %s152, %s153
      %p157 = pneg %p151
      %p158 = scmp.eq.s32.totalorder %s24, 1
      %p159 = por %p157, %p158
      %p160 = scmp.ne.s32.totalorder %s152, %s155
      %p161 = scmp.eq.s32.totalorder %s24, 0
      %p162 = por %p160, %p161
      %p163 = scmp.ne.s32.totalorder %s152, %s155
      %p164 = scmp.eq.s32.totalorder %s29, 1
      %p165 = por %p163, %p164
      %p166 = scmp.ne.s32.totalorder %s155, %s156
      %p167 = scmp.eq.s32.totalorder %s29, 0
      %p168 = por %p166, %p167
      %p169 = scmp.ne.s32.totalorder %s155, %s156
      %p170 = scmp.eq.s32.totalorder %s30, 1
      %p171 = por %p169, %p170
      %p173 = scmp.ne.s32.totalorder %s156, %s172
      %p174 = scmp.eq.s32.totalorder %s30, 0
      %p175 = por %p173, %p174
      %s176 = ssub.s32 %s33, %s49
      %s177 = ssub.s32 %s34, %s45
      %s178 = sor.u32 %s176, %s177
      %p179 = scmp.eq.s32.totalorder %s178, 0
      %s181 = sadd.s32 %s180, 1
      %s182 = scalar_select %p179, %s180, %s181
      %p185 = pneg %p179
      %p186 = scmp.eq.s32.totalorder %s24, 1
      %p187 = por %p185, %p186
      %p188 = scmp.ne.s32.totalorder %s180, %s183
      %p189 = scmp.eq.s32.totalorder %s24, 0
      %p190 = por %p188, %p189
      %p191 = scmp.ne.s32.totalorder %s180, %s183
      %p192 = scmp.eq.s32.totalorder %s29, 1
      %p193 = por %p191, %p192
      %p194 = scmp.ne.s32.totalorder %s183, %s184
      %p195 = scmp.eq.s32.totalorder %s29, 0
      %p196 = por %p194, %p195
      %p197 = scmp.ne.s32.totalorder %s183, %s184
      %p198 = scmp.eq.s32.totalorder %s30, 1
      %p199 = por %p197, %p198
      %p201 = scmp.ne.s32.totalorder %s184, %s200
      %p202 = scmp.eq.s32.totalorder %s30, 0
      %p203 = por %p201, %p202
      %s204 = ssub.s32 %s33, %s49
      %s205 = ssub.s32 %s34, %s45
      %s206 = sor.u32 %s204, %s205
      %p207 = scmp.eq.s32.totalorder %s206, 0
      %s209 = sadd.s32 %s208, 1
      %s210 = scalar_select %p207, %s208, %s209
      %p213 = pneg %p207
      %p214 = scmp.eq.s32.totalorder %s24, 1
      %p215 = por %p213, %p214
      %p216 = scmp.ne.s32.totalorder %s208, %s211
      %p217 = scmp.eq.s32.totalorder %s24, 0
      %p218 = por %p216, %p217
      %p219 = scmp.ne.s32.totalorder %s208, %s211
      %p220 = scmp.eq.s32.totalorder %s29, 1
      %p221 = por %p219, %p220
      %p222 = scmp.ne.s32.totalorder %s211, %s212
      %p223 = scmp.eq.s32.totalorder %s29, 0
      %p224 = por %p222, %p223
      %p225 = scmp.ne.s32.totalorder %s211, %s212
      %p226 = scmp.eq.s32.totalorder %s30, 1
      %p227 = por %p225, %p226
      %p229 = scmp.ne.s32.totalorder %s212, %s228
      %p230 = scmp.eq.s32.totalorder %s30, 0
      %p231 = por %p229, %p230
      %s232 = ssub.s32 %s33, %s49
      %p233 = scmp.eq.s32.totalorder %s232, 0
      %s235 = sadd.s32 %s234, 1
      %s236 = scalar_select %p233, %s234, %s235
      %p239 = pneg %p233
      %p240 = scmp.eq.s32.totalorder %s24, 1
      %p241 = por %p239, %p240
      %p242 = scmp.ne.s32.totalorder %s234, %s237
      %p243 = scmp.eq.s32.totalorder %s24, 0
      %p244 = por %p242, %p243
      %p245 = scmp.ne.s32.totalorder %s234, %s237
      %p246 = scmp.eq.s32.totalorder %s29, 1
      %p247 = por %p245, %p246
      %p248 = scmp.ne.s32.totalorder %s237, %s238
      %p249 = scmp.eq.s32.totalorder %s29, 0
      %p250 = por %p248, %p249
      %p251 = scmp.ne.s32.totalorder %s237, %s238
      %p252 = scmp.eq.s32.totalorder %s30, 1
      %p253 = por %p251, %p252
      %p255 = scmp.ne.s32.totalorder %s238, %s254
      %p256 = scmp.eq.s32.totalorder %s30, 0
      %p257 = por %p255, %p256
      %s258 = ssub.s32 %s33, %s49
      %p259 = scmp.eq.s32.totalorder %s258, 0
      %s261 = sadd.s32 %s260, 1
      %s262 = scalar_select %p259, %s260, %s261
      %p265 = pneg %p259
      %p266 = scmp.eq.s32.totalorder %s24, 1
      %p267 = por %p265, %p266
      %p268 = scmp.ne.s32.totalorder %s260, %s263
      %p269 = scmp.eq.s32.totalorder %s24, 0
      %p270 = por %p268, %p269
      %p271 = scmp.ne.s32.totalorder %s260, %s263
      %p272 = scmp.eq.s32.totalorder %s29, 1
      %p273 = por %p271, %p272
      %p274 = scmp.ne.s32.totalorder %s263, %s264
      %p275 = scmp.eq.s32.totalorder %s29, 0
      %p276 = por %p274, %p275
      %p277 = scmp.ne.s32.totalorder %s263, %s264
      %p278 = scmp.eq.s32.totalorder %s30, 1
      %p279 = por %p277, %p278
      %p281 = scmp.ne.s32.totalorder %s264, %s280
      %p282 = scmp.eq.s32.totalorder %s30, 0
      %p283 = por %p281, %p282
      %s284 = ssub.s32 %s33, %s49
      %p285 = scmp.eq.s32.totalorder %s284, 0
      %s287 = sadd.s32 %s286, 1
      %s288 = scalar_select %p285, %s286, %s287
      %p291 = pneg %p285
      %p292 = scmp.eq.s32.totalorder %s24, 1
      %p293 = por %p291, %p292
      %p294 = scmp.ne.s32.totalorder %s286, %s289
      %p295 = scmp.eq.s32.totalorder %s24, 0
      %p296 = por %p294, %p295
      %p297 = scmp.ne.s32.totalorder %s286, %s289
      %p298 = scmp.eq.s32.totalorder %s29, 1
      %p299 = por %p297, %p298
      %p300 = scmp.ne.s32.totalorder %s289, %s290
      %p301 = scmp.eq.s32.totalorder %s29, 0
      %p302 = por %p300, %p301
      %p303 = scmp.ne.s32.totalorder %s289, %s290
      %p304 = scmp.eq.s32.totalorder %s30, 1
      %p305 = por %p303, %p304
      %p307 = scmp.ne.s32.totalorder %s290, %s306
      %p308 = scmp.eq.s32.totalorder %s30, 0
      %p309 = por %p307, %p308
      %s310 = ssub.s32 %s31, %s57
      %s311 = ssub.s32 %s33, %s49
      %s312 = sor.u32 %s310, %s311
      %s313 = ssub.s32 %s32, %s53
      %s314 = sor.u32 %s312, %s313
      %p315 = scmp.eq.s32.totalorder %s314, 0
      %s317 = sadd.s32 %s316, 1
      %s318 = scalar_select %p315, %s316, %s317
      %p321 = pneg %p315
      %p322 = scmp.eq.s32.totalorder %s24, 1
      %p323 = por %p321, %p322
      %p324 = scmp.ne.s32.totalorder %s316, %s319
      %p325 = scmp.eq.s32.totalorder %s24, 0
      %p326 = por %p324, %p325
      %p327 = scmp.ne.s32.totalorder %s316, %s319
      %p328 = scmp.eq.s32.totalorder %s29, 1
      %p329 = por %p327, %p328
      %p330 = scmp.ne.s32.totalorder %s319, %s320
      %p331 = scmp.eq.s32.totalorder %s29, 0
      %p332 = por %p330, %p331
      %p333 = scmp.ne.s32.totalorder %s319, %s320
      %p334 = scmp.eq.s32.totalorder %s30, 1
      %p335 = por %p333, %p334
      %p337 = scmp.ne.s32.totalorder %s320, %s336
      %p338 = scmp.eq.s32.totalorder %s30, 0
      %p339 = por %p337, %p338
      %s340 = ssub.s32 %s31, %s57
      %s341 = ssub.s32 %s33, %s49
      %s342 = sor.u32 %s340, %s341
      %s343 = ssub.s32 %s32, %s53
      %s344 = sor.u32 %s342, %s343
      %p345 = scmp.eq.s32.totalorder %s344, 0
      %s347 = sadd.s32 %s346, 1
      %s348 = scalar_select %p345, %s346, %s347
      %p351 = pneg %p345
      %p352 = scmp.eq.s32.totalorder %s24, 1
      %p353 = por %p351, %p352
      %p354 = scmp.ne.s32.totalorder %s346, %s349
      %p355 = scmp.eq.s32.totalorder %s24, 0
      %p356 = por %p354, %p355
      %p357 = scmp.ne.s32.totalorder %s346, %s349
      %p358 = scmp.eq.s32.totalorder %s29, 1
      %p359 = por %p357, %p358
      %p360 = scmp.ne.s32.totalorder %s349, %s350
      %p361 = scmp.eq.s32.totalorder %s29, 0
      %p362 = por %p360, %p361
      %p363 = scmp.ne.s32.totalorder %s349, %s350
      %p364 = scmp.eq.s32.totalorder %s30, 1
      %p365 = por %p363, %p364
      %p367 = scmp.ne.s32.totalorder %s350, %s366
      %p368 = scmp.eq.s32.totalorder %s30, 0
      %p369 = por %p367, %p368
      %s370 = ssub.s32 %s31, %s57
      %s371 = ssub.s32 %s33, %s49
      %s372 = sor.u32 %s370, %s371
      %s373 = ssub.s32 %s32, %s53
      %s374 = sor.u32 %s372, %s373
      %p375 = scmp.eq.s32.totalorder %s374, 0
      %s377 = sadd.s32 %s376, 1
      %s378 = scalar_select %p375, %s376, %s377
      %p381 = pneg %p375
      %p382 = scmp.eq.s32.totalorder %s24, 1
      %p383 = por %p381, %p382
      %p384 = scmp.ne.s32.totalorder %s376, %s379
      %p385 = scmp.eq.s32.totalorder %s24, 0
      %p386 = por %p384, %p385
      %p387 = scmp.ne.s32.totalorder %s376, %s379
      %p388 = scmp.eq.s32.totalorder %s29, 1
      %p389 = por %p387, %p388
      %p390 = scmp.ne.s32.totalorder %s379, %s380
      %p391 = scmp.eq.s32.totalorder %s29, 0
      %p392 = por %p390, %p391
      %p393 = scmp.ne.s32.totalorder %s379, %s380
      %p394 = scmp.eq.s32.totalorder %s30, 1
      %p395 = por %p393, %p394
      %p397 = scmp.ne.s32.totalorder %s380, %s396
      %p398 = scmp.eq.s32.totalorder %s30, 0
      %p399 = por %p397, %p398
      %p400 = scmp.le.s32.totalorder 1, %s24
      %p401 = scmp.lt.s32.totalorder %s24, 3
      %p402 = pnand %p400, %p401
      %p403 = pneg %p402
      // Predicated region
      $region9: #{tpu_custom_call.1} parent=5 // pred_check
        _
      $region10: #{tpu_custom_call.1} parent=5 // pred_check_branch
        %405 = sbr.rel (%p402) target = $region12
      $region11: #{tpu_custom_call.1} parent=5 // pred_region
        %s406 = ssub.s32 %s24, 1
        // Predicated region
        $region13: #{tpu_custom_call.1} parent=11 // pred_check
          %p407 = pneg %p168
        $region14: #{tpu_custom_call.1} parent=11 // pred_check_branch
          %409 = sbr.rel (%p407) target = $region16
        $region15: #{tpu_custom_call.1} parent=11 // pred_region
          %s410 = smul.u32 4, %s37
          %s411 = smul.u32 4, %s38
          %p412 = scmp.lt.s32.totalorder %s410, 3
          %s413 = scalar_select %p412, %s410, 3
          %p414 = scmp.lt.s32.totalorder %s411, 3
          %s415 = scalar_select %p414, %s411, 3
          %s416 = smul.addr %s413, 4
          %s417 = sadd.s32 %s415, %s416
          %s418 = smul.addr %s417, 8
          %s419 = scalar_lea.vmem %s3, %s418
          %s420 = smul.u32 4, %s37
          %s421 = smul.u32 4, %s38
        $region16: #{tpu_custom_call.1} parent=11 // pred_fallthru
          _
        // Predicated region
        $region17: #{tpu_custom_call.1} parent=11 // pred_check
          %p422 = pneg %p196
        $region18: #{tpu_custom_call.1} parent=11 // pred_check_branch
          %424 = sbr.rel (%p422) target = $region20
        $region19: #{tpu_custom_call.1} parent=11 // pred_region
          %s425 = smul.u32 4, %s37
          %s426 = smul.u32 4, %s38
          %p427 = scmp.lt.s32.totalorder %s425, 3
          %s428 = scalar_select %p427, %s425, 3
          %p429 = scmp.lt.s32.totalorder %s426, 3
          %s430 = scalar_select %p429, %s426, 3
          %s431 = smul.addr %s428, 4
          %s432 = sadd.s32 %s430, %s431
          %s433 = smul.addr %s432, 8
          %s434 = scalar_lea.vmem %s4, %s433
          %s435 = smul.u32 4, %s37
          %s436 = smul.u32 4, %s38
        $region20: #{tpu_custom_call.1} parent=11 // pred_fallthru
          _
        // Predicated region
        $region21: #{tpu_custom_call.1} parent=11 // pred_check
          %p437 = pneg %p224
        $region22: #{tpu_custom_call.1} parent=11 // pred_check_branch
          %439 = sbr.rel (%p437) target = $region24
        $region23: #{tpu_custom_call.1} parent=11 // pred_region
          %s440 = smul.u32 4, %s37
          %s441 = smul.u32 4, %s38
          %p442 = scmp.lt.s32.totalorder %s440, 3
          %s443 = scalar_select %p442, %s440, 3
          %p444 = scmp.lt.s32.totalorder %s441, 3
          %s445 = scalar_select %p444, %s441, 3
          %s446 = smul.addr %s443, 4
          %s447 = sadd.s32 %s445, %s446
          %s448 = smul.addr %s447, 8
          %s449 = scalar_lea.vmem %s5, %s448
          %s450 = smul.u32 4, %s37
          %s451 = smul.u32 4, %s38
        $region24: #{tpu_custom_call.1} parent=11 // pred_fallthru
          _
        // Predicated region
        $region25: #{tpu_custom_call.1} parent=11 // pred_check
          %p452 = pneg %p250
        $region26: #{tpu_custom_call.1} parent=11 // pred_check_branch
          %454 = sbr.rel (%p452) target = $region28
        $region27: #{tpu_custom_call.1} parent=11 // pred_region
          %s455 = smul.u32 4, %s37
          %p456 = scmp.lt.s32.totalorder %s455, 3
          %s457 = scalar_select %p456, %s455, 3
          %s458 = scalar_lea.vmem %s6, %s457
          %s459 = smul.u32 4, %s37
        $region28: #{tpu_custom_call.1} parent=11 // pred_fallthru
          _
        // Predicated region
        $region29: #{tpu_custom_call.1} parent=11 // pred_check
          %p460 = pneg %p276
        $region30: #{tpu_custom_call.1} parent=11 // pred_check_branch
          %462 = sbr.rel (%p460) target = $region32
        $region31: #{tpu_custom_call.1} parent=11 // pred_region
          %s463 = smul.u32 4, %s37
          %p464 = scmp.lt.s32.totalorder %s463, 3
          %s465 = scalar_select %p464, %s463, 3
          %s466 = scalar_lea.vmem %s7, %s465
          %s467 = smul.u32 4, %s37
        $region32: #{tpu_custom_call.1} parent=11 // pred_fallthru
          _
        // Predicated region
        $region33: #{tpu_custom_call.1} parent=11 // pred_check
          %p468 = pneg %p302
        $region34: #{tpu_custom_call.1} parent=11 // pred_check_branch
          %470 = sbr.rel (%p468) target = $region36
        $region35: #{tpu_custom_call.1} parent=11 // pred_region
          %s471 = smul.u32 4, %s37
          %p472 = scmp.lt.s32.totalorder %s471, 3
          %s473 = scalar_select %p472, %s471, 3
          %s474 = scalar_lea.vmem %s8, %s473
          %s475 = smul.u32 4, %s37
        $region36: #{tpu_custom_call.1} parent=11 // pred_fallthru
          _
      $region12: #{tpu_custom_call.1} parent=5 // pred_fallthru
        _
      %p476 = scmp.lt.s32.totalorder %s24, 2
      // Predicated region
      $region37: #{tpu_custom_call.1} parent=5 // pred_check
        %p477 = pneg %p476
      $region38: #{tpu_custom_call.1} parent=5 // pred_check_branch
        %479 = sbr.rel (%p477) target = $region40
      $region39: #{tpu_custom_call.1} parent=5 // pred_region
        // Predicated region
        $region41: #{tpu_custom_call.1} parent=39 // pred_check
          %p480 = pneg %p74
        $region42: #{tpu_custom_call.1} parent=39 // pred_check_branch
          %482 = sbr.rel (%p480) target = $region44
        $region43: #{tpu_custom_call.1} parent=39 // pred_region
          %p483 = scmp.lt.s32.totalorder %s31, 1
          %s484 = scalar_select %p483, %s31, 1
          %p485 = scmp.lt.s32.totalorder %s32, 0
          %s486 = scalar_select %p485, %s32, 0
          %p487 = scmp.lt.s32.totalorder %s34, 0
          %s488 = scalar_select %p487, %s34, 0
          %s489 = sadd.s32 %s488, %s486
          %s490 = sadd.s32 %s489, %s484
          %s491 = smul.addr %s490, 8
          %s492 = scalar_lea.vmem %s0, %s491
        $region44: #{tpu_custom_call.1} parent=39 // pred_fallthru
          _
        // Predicated region
        $region45: #{tpu_custom_call.1} parent=39 // pred_check
          %p493 = pneg %p104
        $region46: #{tpu_custom_call.1} parent=39 // pred_check_branch
          %495 = sbr.rel (%p493) target = $region48
        $region47: #{tpu_custom_call.1} parent=39 // pred_region
          %p496 = scmp.lt.s32.totalorder %s31, 1
          %s497 = scalar_select %p496, %s31, 1
          %p498 = scmp.lt.s32.totalorder %s32, 0
          %s499 = scalar_select %p498, %s32, 0
          %p500 = scmp.lt.s32.totalorder %s34, 0
          %s501 = scalar_select %p500, %s34, 0
          %s502 = sadd.s32 %s501, %s499
          %s503 = sadd.s32 %s502, %s497
          %s504 = smul.addr %s503, 8
          %s505 = scalar_lea.vmem %s1, %s504
        $region48: #{tpu_custom_call.1} parent=39 // pred_fallthru
          _
        // Predicated region
        $region49: #{tpu_custom_call.1} parent=39 // pred_check
          %p506 = pneg %p134
        $region50: #{tpu_custom_call.1} parent=39 // pred_check_branch
          %508 = sbr.rel (%p506) target = $region52
        $region51: #{tpu_custom_call.1} parent=39 // pred_region
          %p509 = scmp.lt.s32.totalorder %s31, 1
          %s510 = scalar_select %p509, %s31, 1
          %p511 = scmp.lt.s32.totalorder %s32, 0
          %s512 = scalar_select %p511, %s32, 0
          %p513 = scmp.lt.s32.totalorder %s34, 0
          %s514 = scalar_select %p513, %s34, 0
          %s515 = sadd.s32 %s514, %s512
          %s516 = sadd.s32 %s515, %s510
          %s517 = smul.addr %s516, 8
          %s518 = scalar_lea.vmem %s2, %s517
        $region52: #{tpu_custom_call.1} parent=39 // pred_fallthru
          _
      $region40: #{tpu_custom_call.1} parent=5 // pred_fallthru
        _
      %p519 = scmp.le.s32.totalorder 1, %s24
      %p520 = scmp.lt.s32.totalorder %s24, 3
      %p521 = pnand %p519, %p520
      %p522 = pneg %p521
      // Predicated region
      $region53: #{tpu_custom_call.1} parent=5 // pred_check
        _
      $region54: #{tpu_custom_call.1} parent=5 // pred_check_branch
        %524 = sbr.rel (%p521) target = $region56
      $region55: #{tpu_custom_call.1} parent=5 // pred_region
        %s525 = ssub.s32 %s24, 1
        %p526 = scmp.lt.s32.totalorder %s35, 1
        %s527 = scalar_select %p526, %s35, 1
        %p528 = scmp.lt.s32.totalorder %s36, 0
        %s529 = scalar_select %p528, %s36, 0
        %p530 = scmp.lt.s32.totalorder %s38, 0
        %s531 = scalar_select %p530, %s38, 0
        %s532 = sadd.s32 %s531, %s529
        %s533 = sadd.s32 %s532, %s527
        %s534 = smul.addr %s533, 8
        %s535 = scalar_lea.vmem %s0, %s534
        %p536 = pneg %p80
        %p537 = pneg %p77
        %p538 = scmp.lt.s32.totalorder %s35, 1
        %s539 = scalar_select %p538, %s35, 1
        %p540 = scmp.lt.s32.totalorder %s36, 0
        %s541 = scalar_select %p540, %s36, 0
        %p542 = scmp.lt.s32.totalorder %s38, 0
        %s543 = scalar_select %p542, %s38, 0
        %s544 = sadd.s32 %s543, %s541
        %s545 = sadd.s32 %s544, %s539
        %s546 = smul.addr %s545, 8
        %s547 = scalar_lea.vmem %s1, %s546
        %p548 = pneg %p110
        %p549 = pneg %p107
        %p550 = scmp.lt.s32.totalorder %s35, 1
        %s551 = scalar_select %p550, %s35, 1
        %p552 = scmp.lt.s32.totalorder %s36, 0
        %s553 = scalar_select %p552, %s36, 0
        %p554 = scmp.lt.s32.totalorder %s38, 0
        %s555 = scalar_select %p554, %s38, 0
        %s556 = sadd.s32 %s555, %s553
        %s557 = sadd.s32 %s556, %s551
        %s558 = smul.addr %s557, 8
        %s559 = scalar_lea.vmem %s2, %s558
        %p560 = pneg %p140
        %p561 = pneg %p137
        %s562 = smul.u32 4, %s37
        %s563 = smul.u32 4, %s38
        %p564 = scmp.lt.s32.totalorder %s562, 3
        %s565 = scalar_select %p564, %s562, 3
        %p566 = scmp.lt.s32.totalorder %s563, 3
        %s567 = scalar_select %p566, %s563, 3
        %s568 = smul.addr %s565, 4
        %s569 = sadd.s32 %s567, %s568
        %s570 = smul.addr %s569, 8
        %s571 = scalar_lea.vmem %s3, %s570
        %p572 = pneg %p168
        %p573 = pneg %p165
        %s574 = smul.u32 4, %s37
        %s575 = smul.u32 4, %s38
        %p576 = scmp.lt.s32.totalorder %s574, 3
        %s577 = scalar_select %p576, %s574, 3
        %p578 = scmp.lt.s32.totalorder %s575, 3
        %s579 = scalar_select %p578, %s575, 3
        %s580 = smul.addr %s577, 4
        %s581 = sadd.s32 %s579, %s580
        %s582 = smul.addr %s581, 8
        %s583 = scalar_lea.vmem %s4, %s582
        %p584 = pneg %p196
        %p585 = pneg %p193
        %s586 = smul.u32 4, %s37
        %s587 = smul.u32 4, %s38
        %p588 = scmp.lt.s32.totalorder %s586, 3
        %s589 = scalar_select %p588, %s586, 3
        %p590 = scmp.lt.s32.totalorder %s587, 3
        %s591 = scalar_select %p590, %s587, 3
        %s592 = smul.addr %s589, 4
        %s593 = sadd.s32 %s591, %s592
        %s594 = smul.addr %s593, 8
        %s595 = scalar_lea.vmem %s5, %s594
        %p596 = pneg %p224
        %p597 = pneg %p221
        %s598 = smul.u32 4, %s37
        %p599 = scmp.lt.s32.totalorder %s598, 3
        %s600 = scalar_select %p599, %s598, 3
        %s601 = scalar_lea.vmem %s6, %s600
        %p602 = pneg %p250
        %p603 = pneg %p247
        %s604 = smul.u32 4, %s37
        %p605 = scmp.lt.s32.totalorder %s604, 3
        %s606 = scalar_select %p605, %s604, 3
        %s607 = scalar_lea.vmem %s7, %s606
        %p608 = pneg %p276
        %p609 = pneg %p273
        %s610 = smul.u32 4, %s37
        %p611 = scmp.lt.s32.totalorder %s610, 3
        %s612 = scalar_select %p611, %s610, 3
        %s613 = scalar_lea.vmem %s8, %s612
        %p614 = pneg %p302
        %p615 = pneg %p299
        %p616 = pneg %p332
        %p617 = pneg %p329
        %s618 = sand.u32 %s319, 1
        %s619 = scalar_lea.sflag [#allocation6], %s618
        %s620 = sand.u32 %s319, 1
        %s621 = smul.addr %s620, 32
        %s622 = scalar_lea.vmem [#allocation5], %s621
        %p623 = pneg %p362
        %p624 = pneg %p359
        %s625 = sand.u32 %s29, 1
        %s626 = scalar_lea.sflag [#allocation8], %s625
        %s627 = sand.u32 %s349, 1
        %s628 = smul.addr %s627, 32
        %s629 = scalar_lea.vmem [#allocation7], %s628
        %p630 = pneg %p392
        %p631 = pneg %p389
        %s632 = sand.u32 %s29, 1
        %s633 = scalar_lea.sflag [#allocation8], %s632
        %s634 = sand.u32 %s379, 1
        %s635 = smul.addr %s634, 32
        %s636 = scalar_lea.vmem [#allocation9], %s635
        %p637 = scmp.lt.s32.totalorder %s35, 1
        %s638 = scalar_select %p637, %s35, 1
        %p639 = scmp.lt.s32.totalorder %s36, 0
        %s640 = scalar_select %p639, %s36, 0
        %p641 = scmp.lt.s32.totalorder %s38, 0
        %s642 = scalar_select %p641, %s38, 0
        %s643 = sadd.s32 %s642, %s640
        %s644 = sadd.s32 %s643, %s638
        %s645 = smul.addr %s644, 8
        %s646 = scalar_lea.vmem %s0, %s645
        %p647 = scmp.lt.s32.totalorder %s35, 1
        %s648 = scalar_select %p647, %s35, 1
        %p649 = scmp.lt.s32.totalorder %s36, 0
        %s650 = scalar_select %p649, %s36, 0
        %p651 = scmp.lt.s32.totalorder %s38, 0
        %s652 = scalar_select %p651, %s38, 0
        %s653 = sadd.s32 %s652, %s650
        %s654 = sadd.s32 %s653, %s648
        %s655 = smul.addr %s654, 8
        %s656 = scalar_lea.vmem %s1, %s655
        %p657 = scmp.lt.s32.totalorder %s35, 1
        %s658 = scalar_select %p657, %s35, 1
        %p659 = scmp.lt.s32.totalorder %s36, 0
        %s660 = scalar_select %p659, %s36, 0
        %p661 = scmp.lt.s32.totalorder %s38, 0
        %s662 = scalar_select %p661, %s38, 0
        %s663 = sadd.s32 %s662, %s660
        %s664 = sadd.s32 %s663, %s658
        %s665 = smul.addr %s664, 8
        %s666 = scalar_lea.vmem %s2, %s665
        %s667 = smul.u32 4, %s37
        %s668 = smul.u32 4, %s38
        %p669 = scmp.lt.s32.totalorder %s667, 3
        %s670 = scalar_select %p669, %s667, 3
        %p671 = scmp.lt.s32.totalorder %s668, 3
        %s672 = scalar_select %p671, %s668, 3
        %s673 = smul.addr %s670, 4
        %s674 = sadd.s32 %s672, %s673
        %s675 = smul.addr %s674, 8
        %s676 = scalar_lea.vmem %s3, %s675
        %s677 = smul.u32 4, %s37
        %s678 = smul.u32 4, %s38
        %s679 = smul.u32 4, %s37
        %s680 = smul.u32 4, %s38
        %p681 = scmp.lt.s32.totalorder %s679, 3
        %s682 = scalar_select %p681, %s679, 3
        %p683 = scmp.lt.s32.totalorder %s680, 3
        %s684 = scalar_select %p683, %s680, 3
        %s685 = smul.addr %s682, 4
        %s686 = sadd.s32 %s684, %s685
        %s687 = smul.addr %s686, 8
        %s688 = scalar_lea.vmem %s4, %s687
        %s689 = smul.u32 4, %s37
        %s690 = smul.u32 4, %s38
        %s691 = smul.u32 4, %s37
        %s692 = smul.u32 4, %s38
        %p693 = scmp.lt.s32.totalorder %s691, 3
        %s694 = scalar_select %p693, %s691, 3
        %p695 = scmp.lt.s32.totalorder %s692, 3
        %s696 = scalar_select %p695, %s692, 3
        %s697 = smul.addr %s694, 4
        %s698 = sadd.s32 %s696, %s697
        %s699 = smul.addr %s698, 8
        %s700 = scalar_lea.vmem %s5, %s699
        %s701 = smul.u32 4, %s37
        %s702 = smul.u32 4, %s38
        %s703 = smul.u32 4, %s37
        %p704 = scmp.lt.s32.totalorder %s703, 3
        %s705 = scalar_select %p704, %s703, 3
        %s706 = scalar_lea.vmem %s6, %s705
        %s707 = smul.u32 4, %s37
        %s708 = smul.u32 4, %s37
        %p709 = scmp.lt.s32.totalorder %s708, 3
        %s710 = scalar_select %p709, %s708, 3
        %s711 = scalar_lea.vmem %s7, %s710
        %s712 = smul.u32 4, %s37
        %s713 = smul.u32 4, %s37
        %p714 = scmp.lt.s32.totalorder %s713, 3
        %s715 = scalar_select %p714, %s713, 3
        %s716 = scalar_lea.vmem %s8, %s715
        %s717 = smul.u32 4, %s37
        %s718 = smul.u32 4, %s37
        %s719 = smul.u32 4, %s37
        %s720 = smul.u32 4, %s37
        %p721 = scmp.eq.s32.totalorder %s38, 0
        // Predicated region
        $region57: #{tpu_custom_call.1} parent=55 // pred_check
          %p722 = pneg %p721
        $region58: #{tpu_custom_call.1} parent=55 // pred_check_branch
          %724 = sbr.rel (%p722) target = $region60
        $region59: #{tpu_custom_call.1} parent=55 // pred_region
          %vm725 = vcmask 64512
          %726 = vst.msk [vmem:[#allocation2] sm:$0xff] %vm725, 0.0
          %727 = vst.msk [vmem:[#allocation2 + $0x8] sm:$0xff] %vm725, 0.0
          %728 = vst.msk [vmem:[#allocation2 + $0x10] sm:$0xff] %vm725, 0.0
          %729 = vst.msk [vmem:[#allocation2 + $0x18] sm:$0xff] %vm725, 0.0
          %730 = vst.msk [vmem:[#allocation3] sm:$0xff] %vm725, 0.0
          %731 = vst.msk [vmem:[#allocation3 + $0x8] sm:$0xff] %vm725, 0.0
          %732 = vst.msk [vmem:[#allocation3 + $0x10] sm:$0xff] %vm725, 0.0
          %733 = vst.msk [vmem:[#allocation3 + $0x18] sm:$0xff] %vm725, 0.0
          %734 = vst.msk [vmem:[#allocation4] sm:$0xff] %vm725, 0.0
          %735 = vst.msk [vmem:[#allocation4 + $0x8] sm:$0xff] %vm725, 0.0
          %736 = vst.msk [vmem:[#allocation4 + $0x10] sm:$0xff] %vm725, 0.0
          %737 = vst.msk [vmem:[#allocation4 + $0x18] sm:$0xff] %vm725, 0.0
        $region60: #{tpu_custom_call.1} parent=55 // pred_fallthru
          _
        %v738 = vld [vmem:[%s646] sm:$0xff]
        %v739 = vld [vmem:[%s656] sm:$0xff]
        %v740 = vld [vmem:[%s666] sm:$0xff]
        %v741 = vld [vmem:[#allocation2] sm:$0xff]
        %v742 = vld [vmem:[%s676] sm:$0xff]
        %v743 = vld [vmem:[%s676 + $0x8] sm:$0xff]
        %v744 = vld [vmem:[%s676 + $0x10] sm:$0xff]
        %v745 = vld [vmem:[%s676 + $0x18] sm:$0xff]
        %vm746 = vcmask 261120
        %v748 = vsel %vm746, %v738, 0
        %750 = vmatprep.subr.mxu0 0.0
        %751 = vmatpush1.msra.mxu0 0.0
        %752 = vmatprep.subr.mxu0 0.0
        %753 = vmatpush1.msra.mxu0 0.0
        %754 = vmatprep.subr.mxu0 0.0
        %755 = vmatpush1.msra.mxu0 0.0
        %756 = vmatprep.subr.mxu0 0.0
        %757 = vmatpush1.msra.mxu0 0.0
        %758 = vmatprep.subr.mxu0 0.0
        %759 = vmatpush1.msra.mxu0 0.0
        %760 = vmatprep.subr.mxu0 0.0
        %761 = vmatpush1.msra.mxu0 0.0
        %762 = vmatprep.subr.mxu0 0.0
        %763 = vmatpush1.msra.mxu0 0.0
        %764 = vmatprep.subr.mxu0 0.0
        %765 = vmatpush1.msra.mxu0 0.0
        %766 = vmatprep.subr.mxu0 0.0
        %767 = vmatpush1.msra.mxu0 0.0
        %768 = vmatprep.subr.mxu0 0.0
        %769 = vmatpush1.msra.mxu0 0.0
        %770 = vmatprep.subr.mxu0 0.0
        %771 = vmatpush1.msra.mxu0 0.0
        %772 = vmatprep.subr.mxu0 0.0
        %773 = vmatpush1.msra.mxu0 0.0
        %774 = vmatprep.subr.mxu0 0.0
        %775 = vmatpush1.msra.mxu0 %v745
        %776 = vmatprep.subr.mxu0 0.0
        %777 = vmatpush1.msra.mxu0 %v744
        %778 = vmatprep.subr.mxu0 0.0
        %779 = vmatpush1.msra.mxu0 %v743
        %780 = vmatprep.subr.mxu0 0.0
        %781 = vmatpush1.msra.mxu0 %v742
        %782 = vmatprep.subr.mxu0 0.0
        %783 = vmatpush2.msra.mxu0 0.0
        %784 = vmatprep.subr.mxu0 0.0
        %785 = vmatpush2.msra.mxu0 0.0
        %786 = vmatprep.subr.mxu0 0.0
        %787 = vmatpush2.msra.mxu0 0.0
        %788 = vmatprep.subr.mxu0 0.0
        %789 = vmatpush2.msra.mxu0 0.0
        %790 = vmatprep.subr.mxu0 0.0
        %791 = vmatpush2.msra.mxu0 0.0
        %792 = vmatprep.subr.mxu0 0.0
        %793 = vmatpush2.msra.mxu0 0.0
        %794 = vmatprep.subr.mxu0 0.0
        %795 = vmatpush2.msra.mxu0 0.0
        %796 = vmatprep.subr.mxu0 0.0
        %797 = vmatpush2.msra.mxu0 0.0
        %798 = vmatprep.subr.mxu0 0.0
        %799 = vmatpush2.msra.mxu0 0.0
        %800 = vmatprep.subr.mxu0 0.0
        %801 = vmatpush2.msra.mxu0 0.0
        %802 = vmatprep.subr.mxu0 0.0
        %803 = vmatpush2.msra.mxu0 0.0
        %804 = vmatprep.subr.mxu0 0.0
        %805 = vmatpush2.msra.mxu0 0.0
        %806 = vmatprep.subr.mxu0 0.0
        %807 = vmatpush2.msra.mxu0 0.0
        %808 = vmatprep.subr.mxu0 0.0
        %809 = vmatpush2.msra.mxu0 0.0
        %810 = vmatprep.subr.mxu0 0.0
        %811 = vmatpush2.msra.mxu0 0.0
        %812 = vmatprep.subr.mxu0 0.0
        %813 = vmatpush2.msra.mxu0 0.0
        %814 = vmatprep.mubr.f32.mxu0 0.0
        %815 = vmatmul.mubr.f32.gmra.mxu0 %v748
        %v816 = vpop.f32.mrf.mxu0
        %v817 = vadd.f32 0.0, %v816
        %v818 = vpop.f32.mrf.mxu0
        %819 = vdwg.mxu0
        %v820 = vadd.f32 %v741, %v817
        %vm821 = vcmask 64512
        %822 = vst.msk [vmem:[#allocation2] sm:$0xff] %vm821, %v820
        %v823 = vld [vmem:[#allocation3] sm:$0xff]
        %v824 = vld [vmem:[%s688] sm:$0xff]
        %v825 = vld [vmem:[%s688 + $0x8] sm:$0xff]
        %v826 = vld [vmem:[%s688 + $0x10] sm:$0xff]
        %v827 = vld [vmem:[%s688 + $0x18] sm:$0xff]
        %v829 = vsel %vm746, %v739, 0
        %831 = vmatprep.subr.mxu0 0.0
        %832 = vmatpush1.msra.mxu0 0.0
        %833 = vmatprep.subr.mxu0 0.0
        %834 = vmatpush1.msra.mxu0 0.0
        %835 = vmatprep.subr.mxu0 0.0
        %836 = vmatpush1.msra.mxu0 0.0
        %837 = vmatprep.subr.mxu0 0.0
        %838 = vmatpush1.msra.mxu0 0.0
        %839 = vmatprep.subr.mxu0 0.0
        %840 = vmatpush1.msra.mxu0 0.0
        %841 = vmatprep.subr.mxu0 0.0
        %842 = vmatpush1.msra.mxu0 0.0
        %843 = vmatprep.subr.mxu0 0.0
        %844 = vmatpush1.msra.mxu0 0.0
        %845 = vmatprep.subr.mxu0 0.0
        %846 = vmatpush1.msra.mxu0 0.0
        %847 = vmatprep.subr.mxu0 0.0
        %848 = vmatpush1.msra.mxu0 0.0
        %849 = vmatprep.subr.mxu0 0.0
        %850 = vmatpush1.msra.mxu0 0.0
        %851 = vmatprep.subr.mxu0 0.0
        %852 = vmatpush1.msra.mxu0 0.0
        %853 = vmatprep.subr.mxu0 0.0
        %854 = vmatpush1.msra.mxu0 0.0
        %855 = vmatprep.subr.mxu0 0.0
        %856 = vmatpush1.msra.mxu0 %v827
        %857 = vmatprep.subr.mxu0 0.0
        %858 = vmatpush1.msra.mxu0 %v826
        %859 = vmatprep.subr.mxu0 0.0
        %860 = vmatpush1.msra.mxu0 %v825
        %861 = vmatprep.subr.mxu0 0.0
        %862 = vmatpush1.msra.mxu0 %v824
        %863 = vmatprep.subr.mxu0 0.0
        %864 = vmatpush2.msra.mxu0 0.0
        %865 = vmatprep.subr.mxu0 0.0
        %866 = vmatpush2.msra.mxu0 0.0
        %867 = vmatprep.subr.mxu0 0.0
        %868 = vmatpush2.msra.mxu0 0.0
        %869 = vmatprep.subr.mxu0 0.0
        %870 = vmatpush2.msra.mxu0 0.0
        %871 = vmatprep.subr.mxu0 0.0
        %872 = vmatpush2.msra.mxu0 0.0
        %873 = vmatprep.subr.mxu0 0.0
        %874 = vmatpush2.msra.mxu0 0.0
        %875 = vmatprep.subr.mxu0 0.0
        %876 = vmatpush2.msra.mxu0 0.0
        %877 = vmatprep.subr.mxu0 0.0
        %878 = vmatpush2.msra.mxu0 0.0
        %879 = vmatprep.subr.mxu0 0.0
        %880 = vmatpush2.msra.mxu0 0.0
        %881 = vmatprep.subr.mxu0 0.0
        %882 = vmatpush2.msra.mxu0 0.0
        %883 = vmatprep.subr.mxu0 0.0
        %884 = vmatpush2.msra.mxu0 0.0
        %885 = vmatprep.subr.mxu0 0.0
        %886 = vmatpush2.msra.mxu0 0.0
        %887 = vmatprep.subr.mxu0 0.0
        %888 = vmatpush2.msra.mxu0 0.0
        %889 = vmatprep.subr.mxu0 0.0
        %890 = vmatpush2.msra.mxu0 0.0
        %891 = vmatprep.subr.mxu0 0.0
        %892 = vmatpush2.msra.mxu0 0.0
        %893 = vmatprep.subr.mxu0 0.0
        %894 = vmatpush2.msra.mxu0 0.0
        %895 = vmatprep.mubr.f32.mxu0 0.0
        %896 = vmatmul.mubr.f32.gmra.mxu0 %v829
        %v897 = vpop.f32.mrf.mxu0
        %v898 = vadd.f32 0.0, %v897
        %v899 = vpop.f32.mrf.mxu0
        %900 = vdwg.mxu0
        %v901 = vadd.f32 %v823, %v898
        %902 = vst.msk [vmem:[#allocation3] sm:$0xff] %vm821, %v901
        %v903 = vld [vmem:[#allocation4] sm:$0xff]
        %v904 = vld [vmem:[%s700] sm:$0xff]
        %v905 = vld [vmem:[%s700 + $0x8] sm:$0xff]
        %v906 = vld [vmem:[%s700 + $0x10] sm:$0xff]
        %v907 = vld [vmem:[%s700 + $0x18] sm:$0xff]
        %v909 = vsel %vm746, %v740, 0
        %911 = vmatprep.subr.mxu0 0.0
        %912 = vmatpush1.msra.mxu0 0.0
        %913 = vmatprep.subr.mxu0 0.0
        %914 = vmatpush1.msra.mxu0 0.0
        %915 = vmatprep.subr.mxu0 0.0
        %916 = vmatpush1.msra.mxu0 0.0
        %917 = vmatprep.subr.mxu0 0.0
        %918 = vmatpush1.msra.mxu0 0.0
        %919 = vmatprep.subr.mxu0 0.0
        %920 = vmatpush1.msra.mxu0 0.0
        %921 = vmatprep.subr.mxu0 0.0
        %922 = vmatpush1.msra.mxu0 0.0
        %923 = vmatprep.subr.mxu0 0.0
        %924 = vmatpush1.msra.mxu0 0.0
        %925 = vmatprep.subr.mxu0 0.0
        %926 = vmatpush1.msra.mxu0 0.0
        %927 = vmatprep.subr.mxu0 0.0
        %928 = vmatpush1.msra.mxu0 0.0
        %929 = vmatprep.subr.mxu0 0.0
        %930 = vmatpush1.msra.mxu0 0.0
        %931 = vmatprep.subr.mxu0 0.0
        %932 = vmatpush1.msra.mxu0 0.0
        %933 = vmatprep.subr.mxu0 0.0
        %934 = vmatpush1.msra.mxu0 0.0
        %935 = vmatprep.subr.mxu0 0.0
        %936 = vmatpush1.msra.mxu0 %v907
        %937 = vmatprep.subr.mxu0 0.0
        %938 = vmatpush1.msra.mxu0 %v906
        %939 = vmatprep.subr.mxu0 0.0
        %940 = vmatpush1.msra.mxu0 %v905
        %941 = vmatprep.subr.mxu0 0.0
        %942 = vmatpush1.msra.mxu0 %v904
        %943 = vmatprep.subr.mxu0 0.0
        %944 = vmatpush2.msra.mxu0 0.0
        %945 = vmatprep.subr.mxu0 0.0
        %946 = vmatpush2.msra.mxu0 0.0
        %947 = vmatprep.subr.mxu0 0.0
        %948 = vmatpush2.msra.mxu0 0.0
        %949 = vmatprep.subr.mxu0 0.0
        %950 = vmatpush2.msra.mxu0 0.0
        %951 = vmatprep.subr.mxu0 0.0
        %952 = vmatpush2.msra.mxu0 0.0
        %953 = vmatprep.subr.mxu0 0.0
        %954 = vmatpush2.msra.mxu0 0.0
        %955 = vmatprep.subr.mxu0 0.0
        %956 = vmatpush2.msra.mxu0 0.0
        %957 = vmatprep.subr.mxu0 0.0
        %958 = vmatpush2.msra.mxu0 0.0
        %959 = vmatprep.subr.mxu0 0.0
        %960 = vmatpush2.msra.mxu0 0.0
        %961 = vmatprep.subr.mxu0 0.0
        %962 = vmatpush2.msra.mxu0 0.0
        %963 = vmatprep.subr.mxu0 0.0
        %964 = vmatpush2.msra.mxu0 0.0
        %965 = vmatprep.subr.mxu0 0.0
        %966 = vmatpush2.msra.mxu0 0.0
        %967 = vmatprep.subr.mxu0 0.0
        %968 = vmatpush2.msra.mxu0 0.0
        %969 = vmatprep.subr.mxu0 0.0
        %970 = vmatpush2.msra.mxu0 0.0
        %971 = vmatprep.subr.mxu0 0.0
        %972 = vmatpush2.msra.mxu0 0.0
        %973 = vmatprep.subr.mxu0 0.0
        %974 = vmatpush2.msra.mxu0 0.0
        %975 = vmatprep.mubr.f32.mxu0 0.0
        %976 = vmatmul.mubr.f32.gmra.mxu0 %v909
        %v977 = vpop.f32.mrf.mxu0
        %v978 = vadd.f32 0.0, %v977
        %v979 = vpop.f32.mrf.mxu0
        %980 = vdwg.mxu0
        %v981 = vadd.f32 %v903, %v978
        %982 = vst.msk [vmem:[#allocation4] sm:$0xff] %vm821, %v981
        %s983 = scalar_lea.vmem [#allocation2], 8
        %v984 = vld [vmem:[%s983] sm:$0xff]
        %s985 = scalar_lea.vmem %s676, 32
        %v986 = vld [vmem:[%s985] sm:$0xff]
        %v987 = vld [vmem:[%s985 + $0x8] sm:$0xff]
        %v988 = vld [vmem:[%s985 + $0x10] sm:$0xff]
        %v989 = vld [vmem:[%s985 + $0x18] sm:$0xff]
        %990 = vmatprep.subr.mxu0 0.0
        %991 = vmatpush1.msra.mxu0 0.0
        %992 = vmatprep.subr.mxu0 0.0
        %993 = vmatpush1.msra.mxu0 0.0
        %994 = vmatprep.subr.mxu0 0.0
        %995 = vmatpush1.msra.mxu0 0.0
        %996 = vmatprep.subr.mxu0 0.0
        %997 = vmatpush1.msra.mxu0 0.0
        %998 = vmatprep.subr.mxu0 0.0
        %999 = vmatpush1.msra.mxu0 0.0
        %1000 = vmatprep.subr.mxu0 0.0
        %1001 = vmatpush1.msra.mxu0 0.0
        %1002 = vmatprep.subr.mxu0 0.0
        %1003 = vmatpush1.msra.mxu0 0.0
        %1004 = vmatprep.subr.mxu0 0.0
        %1005 = vmatpush1.msra.mxu0 0.0
        %1006 = vmatprep.subr.mxu0 0.0
        %1007 = vmatpush1.msra.mxu0 0.0
        %1008 = vmatprep.subr.mxu0 0.0
        %1009 = vmatpush1.msra.mxu0 0.0
        %1010 = vmatprep.subr.mxu0 0.0
        %1011 = vmatpush1.msra.mxu0 0.0
        %1012 = vmatprep.subr.mxu0 0.0
        %1013 = vmatpush1.msra.mxu0 0.0
        %1014 = vmatprep.subr.mxu0 0.0
        %1015 = vmatpush1.msra.mxu0 %v989
        %1016 = vmatprep.subr.mxu0 0.0
        %1017 = vmatpush1.msra.mxu0 %v988
        %1018 = vmatprep.subr.mxu0 0.0
        %1019 = vmatpush1.msra.mxu0 %v987
        %1020 = vmatprep.subr.mxu0 0.0
        %1021 = vmatpush1.msra.mxu0 %v986
        %1022 = vmatprep.subr.mxu0 0.0
        %1023 = vmatpush2.msra.mxu0 0.0
        %1024 = vmatprep.subr.mxu0 0.0
        %1025 = vmatpush2.msra.mxu0 0.0
        %1026 = vmatprep.subr.mxu0 0.0
        %1027 = vmatpush2.msra.mxu0 0.0
        %1028 = vmatprep.subr.mxu0 0.0
        %1029 = vmatpush2.msra.mxu0 0.0
        %1030 = vmatprep.subr.mxu0 0.0
        %1031 = vmatpush2.msra.mxu0 0.0
        %1032 = vmatprep.subr.mxu0 0.0
        %1033 = vmatpush2.msra.mxu0 0.0
        %1034 = vmatprep.subr.mxu0 0.0
        %1035 = vmatpush2.msra.mxu0 0.0
        %1036 = vmatprep.subr.mxu0 0.0
        %1037 = vmatpush2.msra.mxu0 0.0
        %1038 = vmatprep.subr.mxu0 0.0
        %1039 = vmatpush2.msra.mxu0 0.0
        %1040 = vmatprep.subr.mxu0 0.0
        %1041 = vmatpush2.msra.mxu0 0.0
        %1042 = vmatprep.subr.mxu0 0.0
        %1043 = vmatpush2.msra.mxu0 0.0
        %1044 = vmatprep.subr.mxu0 0.0
        %1045 = vmatpush2.msra.mxu0 0.0
        %1046 = vmatprep.subr.mxu0 0.0
        %1047 = vmatpush2.msra.mxu0 0.0
        %1048 = vmatprep.subr.mxu0 0.0
        %1049 = vmatpush2.msra.mxu0 0.0
        %1050 = vmatprep.subr.mxu0 0.0
        %1051 = vmatpush2.msra.mxu0 0.0
        %1052 = vmatprep.subr.mxu0 0.0
        %1053 = vmatpush2.msra.mxu0 0.0
        %1054 = vmatprep.mubr.f32.mxu0 0.0
        %1055 = vmatmul.mubr.f32.gmra.mxu0 %v748
        %v1056 = vpop.f32.mrf.mxu0
        %v1057 = vadd.f32 0.0, %v1056
        %v1058 = vpop.f32.mrf.mxu0
        %1059 = vdwg.mxu0
        %v1060 = vadd.f32 %v984, %v1057
        %1061 = vst.msk [vmem:[%s983] sm:$0xff] %vm821, %v1060
        %s1062 = scalar_lea.vmem [#allocation3], 8
        %v1063 = vld [vmem:[%s1062] sm:$0xff]
        %s1064 = scalar_lea.vmem %s688, 32
        %v1065 = vld [vmem:[%s1064] sm:$0xff]
        %v1066 = vld [vmem:[%s1064 + $0x8] sm:$0xff]
        %v1067 = vld [vmem:[%s1064 + $0x10] sm:$0xff]
        %v1068 = vld [vmem:[%s1064 + $0x18] sm:$0xff]
        %1069 = vmatprep.subr.mxu0 0.0
        %1070 = vmatpush1.msra.mxu0 0.0
        %1071 = vmatprep.subr.mxu0 0.0
        %1072 = vmatpush1.msra.mxu0 0.0
        %1073 = vmatprep.subr.mxu0 0.0
        %1074 = vmatpush1.msra.mxu0 0.0
        %1075 = vmatprep.subr.mxu0 0.0
        %1076 = vmatpush1.msra.mxu0 0.0
        %1077 = vmatprep.subr.mxu0 0.0
        %1078 = vmatpush1.msra.mxu0 0.0
        %1079 = vmatprep.subr.mxu0 0.0
        %1080 = vmatpush1.msra.mxu0 0.0
        %1081 = vmatprep.subr.mxu0 0.0
        %1082 = vmatpush1.msra.mxu0 0.0
        %1083 = vmatprep.subr.mxu0 0.0
        %1084 = vmatpush1.msra.mxu0 0.0
        %1085 = vmatprep.subr.mxu0 0.0
        %1086 = vmatpush1.msra.mxu0 0.0
        %1087 = vmatprep.subr.mxu0 0.0
        %1088 = vmatpush1.msra.mxu0 0.0
        %1089 = vmatprep.subr.mxu0 0.0
        %1090 = vmatpush1.msra.mxu0 0.0
        %1091 = vmatprep.subr.mxu0 0.0
        %1092 = vmatpush1.msra.mxu0 0.0
        %1093 = vmatprep.subr.mxu0 0.0
        %1094 = vmatpush1.msra.mxu0 %v1068
        %1095 = vmatprep.subr.mxu0 0.0
        %1096 = vmatpush1.msra.mxu0 %v1067
        %1097 = vmatprep.subr.mxu0 0.0
        %1098 = vmatpush1.msra.mxu0 %v1066
        %1099 = vmatprep.subr.mxu0 0.0
        %1100 = vmatpush1.msra.mxu0 %v1065
        %1101 = vmatprep.subr.mxu0 0.0
        %1102 = vmatpush2.msra.mxu0 0.0
        %1103 = vmatprep.subr.mxu0 0.0
        %1104 = vmatpush2.msra.mxu0 0.0
        %1105 = vmatprep.subr.mxu0 0.0
        %1106 = vmatpush2.msra.mxu0 0.0
        %1107 = vmatprep.subr.mxu0 0.0
        %1108 = vmatpush2.msra.mxu0 0.0
        %1109 = vmatprep.subr.mxu0 0.0
        %1110 = vmatpush2.msra.mxu0 0.0
        %1111 = vmatprep.subr.mxu0 0.0
        %1112 = vmatpush2.msra.mxu0 0.0
        %1113 = vmatprep.subr.mxu0 0.0
        %1114 = vmatpush2.msra.mxu0 0.0
        %1115 = vmatprep.subr.mxu0 0.0
        %1116 = vmatpush2.msra.mxu0 0.0
        %1117 = vmatprep.subr.mxu0 0.0
        %1118 = vmatpush2.msra.mxu0 0.0
        %1119 = vmatprep.subr.mxu0 0.0
        %1120 = vmatpush2.msra.mxu0 0.0
        %1121 = vmatprep.subr.mxu0 0.0
        %1122 = vmatpush2.msra.mxu0 0.0
        %1123 = vmatprep.subr.mxu0 0.0
        %1124 = vmatpush2.msra.mxu0 0.0
        %1125 = vmatprep.subr.mxu0 0.0
        %1126 = vmatpush2.msra.mxu0 0.0
        %1127 = vmatprep.subr.mxu0 0.0
        %1128 = vmatpush2.msra.mxu0 0.0
        %1129 = vmatprep.subr.mxu0 0.0
        %1130 = vmatpush2.msra.mxu0 0.0
        %1131 = vmatprep.subr.mxu0 0.0
        %1132 = vmatpush2.msra.mxu0 0.0
        %1133 = vmatprep.mubr.f32.mxu0 0.0
        %1134 = vmatmul.mubr.f32.gmra.mxu0 %v829
        %v1135 = vpop.f32.mrf.mxu0
        %v1136 = vadd.f32 0.0, %v1135
        %v1137 = vpop.f32.mrf.mxu0
        %1138 = vdwg.mxu0
        %v1139 = vadd.f32 %v1063, %v1136
        %1140 = vst.msk [vmem:[%s1062] sm:$0xff] %vm821, %v1139
        %s1141 = scalar_lea.vmem [#allocation4], 8
        %v1142 = vld [vmem:[%s1141] sm:$0xff]
        %s1143 = scalar_lea.vmem %s700, 32
        %v1144 = vld [vmem:[%s1143] sm:$0xff]
        %v1145 = vld [vmem:[%s1143 + $0x8] sm:$0xff]
        %v1146 = vld [vmem:[%s1143 + $0x10] sm:$0xff]
        %v1147 = vld [vmem:[%s1143 + $0x18] sm:$0xff]
        %1148 = vmatprep.subr.mxu0 0.0
        %1149 = vmatpush1.msra.mxu0 0.0
        %1150 = vmatprep.subr.mxu0 0.0
        %1151 = vmatpush1.msra.mxu0 0.0
        %1152 = vmatprep.subr.mxu0 0.0
        %1153 = vmatpush1.msra.mxu0 0.0
        %1154 = vmatprep.subr.mxu0 0.0
        %1155 = vmatpush1.msra.mxu0 0.0
        %1156 = vmatprep.subr.mxu0 0.0
        %1157 = vmatpush1.msra.mxu0 0.0
        %1158 = vmatprep.subr.mxu0 0.0
        %1159 = vmatpush1.msra.mxu0 0.0
        %1160 = vmatprep.subr.mxu0 0.0
        %1161 = vmatpush1.msra.mxu0 0.0
        %1162 = vmatprep.subr.mxu0 0.0
        %1163 = vmatpush1.msra.mxu0 0.0
        %1164 = vmatprep.subr.mxu0 0.0
        %1165 = vmatpush1.msra.mxu0 0.0
        %1166 = vmatprep.subr.mxu0 0.0
        %1167 = vmatpush1.msra.mxu0 0.0
        %1168 = vmatprep.subr.mxu0 0.0
        %1169 = vmatpush1.msra.mxu0 0.0
        %1170 = vmatprep.subr.mxu0 0.0
        %1171 = vmatpush1.msra.mxu0 0.0
        %1172 = vmatprep.subr.mxu0 0.0
        %1173 = vmatpush1.msra.mxu0 %v1147
        %1174 = vmatprep.subr.mxu0 0.0
        %1175 = vmatpush1.msra.mxu0 %v1146
        %1176 = vmatprep.subr.mxu0 0.0
        %1177 = vmatpush1.msra.mxu0 %v1145
        %1178 = vmatprep.subr.mxu0 0.0
        %1179 = vmatpush1.msra.mxu0 %v1144
        %1180 = vmatprep.subr.mxu0 0.0
        %1181 = vmatpush2.msra.mxu0 0.0
        %1182 = vmatprep.subr.mxu0 0.0
        %1183 = vmatpush2.msra.mxu0 0.0
        %1184 = vmatprep.subr.mxu0 0.0
        %1185 = vmatpush2.msra.mxu0 0.0
        %1186 = vmatprep.subr.mxu0 0.0
        %1187 = vmatpush2.msra.mxu0 0.0
        %1188 = vmatprep.subr.mxu0 0.0
        %1189 = vmatpush2.msra.mxu0 0.0
        %1190 = vmatprep.subr.mxu0 0.0
        %1191 = vmatpush2.msra.mxu0 0.0
        %1192 = vmatprep.subr.mxu0 0.0
        %1193 = vmatpush2.msra.mxu0 0.0
        %1194 = vmatprep.subr.mxu0 0.0
        %1195 = vmatpush2.msra.mxu0 0.0
        %1196 = vmatprep.subr.mxu0 0.0
        %1197 = vmatpush2.msra.mxu0 0.0
        %1198 = vmatprep.subr.mxu0 0.0
        %1199 = vmatpush2.msra.mxu0 0.0
        %1200 = vmatprep.subr.mxu0 0.0
        %1201 = vmatpush2.msra.mxu0 0.0
        %1202 = vmatprep.subr.mxu0 0.0
        %1203 = vmatpush2.msra.mxu0 0.0
        %1204 = vmatprep.subr.mxu0 0.0
        %1205 = vmatpush2.msra.mxu0 0.0
        %1206 = vmatprep.subr.mxu0 0.0
        %1207 = vmatpush2.msra.mxu0 0.0
        %1208 = vmatprep.subr.mxu0 0.0
        %1209 = vmatpush2.msra.mxu0 0.0
        %1210 = vmatprep.subr.mxu0 0.0
        %1211 = vmatpush2.msra.mxu0 0.0
        %1212 = vmatprep.mubr.f32.mxu0 0.0
        %1213 = vmatmul.mubr.f32.gmra.mxu0 %v909
        %v1214 = vpop.f32.mrf.mxu0
        %v1215 = vadd.f32 0.0, %v1214
        %v1216 = vpop.f32.mrf.mxu0
        %1217 = vdwg.mxu0
        %v1218 = vadd.f32 %v1142, %v1215
        %1219 = vst.msk [vmem:[%s1141] sm:$0xff] %vm821, %v1218
        %s1220 = scalar_lea.vmem [#allocation2], 16
        %v1221 = vld [vmem:[%s1220] sm:$0xff]
        %s1222 = scalar_lea.vmem %s676, 64
        %v1223 = vld [vmem:[%s1222] sm:$0xff]
        %v1224 = vld [vmem:[%s1222 + $0x8] sm:$0xff]
        %v1225 = vld [vmem:[%s1222 + $0x10] sm:$0xff]
        %v1226 = vld [vmem:[%s1222 + $0x18] sm:$0xff]
        %1227 = vmatprep.subr.mxu0 0.0
        %1228 = vmatpush1.msra.mxu0 0.0
        %1229 = vmatprep.subr.mxu0 0.0
        %1230 = vmatpush1.msra.mxu0 0.0
        %1231 = vmatprep.subr.mxu0 0.0
        %1232 = vmatpush1.msra.mxu0 0.0
        %1233 = vmatprep.subr.mxu0 0.0
        %1234 = vmatpush1.msra.mxu0 0.0
        %1235 = vmatprep.subr.mxu0 0.0
        %1236 = vmatpush1.msra.mxu0 0.0
        %1237 = vmatprep.subr.mxu0 0.0
        %1238 = vmatpush1.msra.mxu0 0.0
        %1239 = vmatprep.subr.mxu0 0.0
        %1240 = vmatpush1.msra.mxu0 0.0
        %1241 = vmatprep.subr.mxu0 0.0
        %1242 = vmatpush1.msra.mxu0 0.0
        %1243 = vmatprep.subr.mxu0 0.0
        %1244 = vmatpush1.msra.mxu0 0.0
        %1245 = vmatprep.subr.mxu0 0.0
        %1246 = vmatpush1.msra.mxu0 0.0
        %1247 = vmatprep.subr.mxu0 0.0
        %1248 = vmatpush1.msra.mxu0 0.0
        %1249 = vmatprep.subr.mxu0 0.0
        %1250 = vmatpush1.msra.mxu0 0.0
        %1251 = vmatprep.subr.mxu0 0.0
        %1252 = vmatpush1.msra.mxu0 %v1226
        %1253 = vmatprep.subr.mxu0 0.0
        %1254 = vmatpush1.msra.mxu0 %v1225
        %1255 = vmatprep.subr.mxu0 0.0
        %1256 = vmatpush1.msra.mxu0 %v1224
        %1257 = vmatprep.subr.mxu0 0.0
        %1258 = vmatpush1.msra.mxu0 %v1223
        %1259 = vmatprep.subr.mxu0 0.0
        %1260 = vmatpush2.msra.mxu0 0.0
        %1261 = vmatprep.subr.mxu0 0.0
        %1262 = vmatpush2.msra.mxu0 0.0
        %1263 = vmatprep.subr.mxu0 0.0
        %1264 = vmatpush2.msra.mxu0 0.0
        %1265 = vmatprep.subr.mxu0 0.0
        %1266 = vmatpush2.msra.mxu0 0.0
        %1267 = vmatprep.subr.mxu0 0.0
        %1268 = vmatpush2.msra.mxu0 0.0
        %1269 = vmatprep.subr.mxu0 0.0
        %1270 = vmatpush2.msra.mxu0 0.0
        %1271 = vmatprep.subr.mxu0 0.0
        %1272 = vmatpush2.msra.mxu0 0.0
        %1273 = vmatprep.subr.mxu0 0.0
        %1274 = vmatpush2.msra.mxu0 0.0
        %1275 = vmatprep.subr.mxu0 0.0
        %1276 = vmatpush2.msra.mxu0 0.0
        %1277 = vmatprep.subr.mxu0 0.0
        %1278 = vmatpush2.msra.mxu0 0.0
        %1279 = vmatprep.subr.mxu0 0.0
        %1280 = vmatpush2.msra.mxu0 0.0
        %1281 = vmatprep.subr.mxu0 0.0
        %1282 = vmatpush2.msra.mxu0 0.0
        %1283 = vmatprep.subr.mxu0 0.0
        %1284 = vmatpush2.msra.mxu0 0.0
        %1285 = vmatprep.subr.mxu0 0.0
        %1286 = vmatpush2.msra.mxu0 0.0
        %1287 = vmatprep.subr.mxu0 0.0
        %1288 = vmatpush2.msra.mxu0 0.0
        %1289 = vmatprep.subr.mxu0 0.0
        %1290 = vmatpush2.msra.mxu0 0.0
        %1291 = vmatprep.mubr.f32.mxu0 0.0
        %1292 = vmatmul.mubr.f32.gmra.mxu0 %v748
        %v1293 = vpop.f32.mrf.mxu0
        %v1294 = vadd.f32 0.0, %v1293
        %v1295 = vpop.f32.mrf.mxu0
        %1296 = vdwg.mxu0
        %v1297 = vadd.f32 %v1221, %v1294
        %1298 = vst.msk [vmem:[%s1220] sm:$0xff] %vm821, %v1297
        %s1299 = scalar_lea.vmem [#allocation3], 16
        %v1300 = vld [vmem:[%s1299] sm:$0xff]
        %s1301 = scalar_lea.vmem %s688, 64
        %v1302 = vld [vmem:[%s1301] sm:$0xff]
        %v1303 = vld [vmem:[%s1301 + $0x8] sm:$0xff]
        %v1304 = vld [vmem:[%s1301 + $0x10] sm:$0xff]
        %v1305 = vld [vmem:[%s1301 + $0x18] sm:$0xff]
        %1306 = vmatprep.subr.mxu0 0.0
        %1307 = vmatpush1.msra.mxu0 0.0
        %1308 = vmatprep.subr.mxu0 0.0
        %1309 = vmatpush1.msra.mxu0 0.0
        %1310 = vmatprep.subr.mxu0 0.0
        %1311 = vmatpush1.msra.mxu0 0.0
        %1312 = vmatprep.subr.mxu0 0.0
        %1313 = vmatpush1.msra.mxu0 0.0
        %1314 = vmatprep.subr.mxu0 0.0
        %1315 = vmatpush1.msra.mxu0 0.0
        %1316 = vmatprep.subr.mxu0 0.0
        %1317 = vmatpush1.msra.mxu0 0.0
        %1318 = vmatprep.subr.mxu0 0.0
        %1319 = vmatpush1.msra.mxu0 0.0
        %1320 = vmatprep.subr.mxu0 0.0
        %1321 = vmatpush1.msra.mxu0 0.0
        %1322 = vmatprep.subr.mxu0 0.0
        %1323 = vmatpush1.msra.mxu0 0.0
        %1324 = vmatprep.subr.mxu0 0.0
        %1325 = vmatpush1.msra.mxu0 0.0
        %1326 = vmatprep.subr.mxu0 0.0
        %1327 = vmatpush1.msra.mxu0 0.0
        %1328 = vmatprep.subr.mxu0 0.0
        %1329 = vmatpush1.msra.mxu0 0.0
        %1330 = vmatprep.subr.mxu0 0.0
        %1331 = vmatpush1.msra.mxu0 %v1305
        %1332 = vmatprep.subr.mxu0 0.0
        %1333 = vmatpush1.msra.mxu0 %v1304
        %1334 = vmatprep.subr.mxu0 0.0
        %1335 = vmatpush1.msra.mxu0 %v1303
        %1336 = vmatprep.subr.mxu0 0.0
        %1337 = vmatpush1.msra.mxu0 %v1302
        %1338 = vmatprep.subr.mxu0 0.0
        %1339 = vmatpush2.msra.mxu0 0.0
        %1340 = vmatprep.subr.mxu0 0.0
        %1341 = vmatpush2.msra.mxu0 0.0
        %1342 = vmatprep.subr.mxu0 0.0
        %1343 = vmatpush2.msra.mxu0 0.0
        %1344 = vmatprep.subr.mxu0 0.0
        %1345 = vmatpush2.msra.mxu0 0.0
        %1346 = vmatprep.subr.mxu0 0.0
        %1347 = vmatpush2.msra.mxu0 0.0
        %1348 = vmatprep.subr.mxu0 0.0
        %1349 = vmatpush2.msra.mxu0 0.0
        %1350 = vmatprep.subr.mxu0 0.0
        %1351 = vmatpush2.msra.mxu0 0.0
        %1352 = vmatprep.subr.mxu0 0.0
        %1353 = vmatpush2.msra.mxu0 0.0
        %1354 = vmatprep.subr.mxu0 0.0
        %1355 = vmatpush2.msra.mxu0 0.0
        %1356 = vmatprep.subr.mxu0 0.0
        %1357 = vmatpush2.msra.mxu0 0.0
        %1358 = vmatprep.subr.mxu0 0.0
        %1359 = vmatpush2.msra.mxu0 0.0
        %1360 = vmatprep.subr.mxu0 0.0
        %1361 = vmatpush2.msra.mxu0 0.0
        %1362 = vmatprep.subr.mxu0 0.0
        %1363 = vmatpush2.msra.mxu0 0.0
        %1364 = vmatprep.subr.mxu0 0.0
        %1365 = vmatpush2.msra.mxu0 0.0
        %1366 = vmatprep.subr.mxu0 0.0
        %1367 = vmatpush2.msra.mxu0 0.0
        %1368 = vmatprep.subr.mxu0 0.0
        %1369 = vmatpush2.msra.mxu0 0.0
        %1370 = vmatprep.mubr.f32.mxu0 0.0
        %1371 = vmatmul.mubr.f32.gmra.mxu0 %v829
        %v1372 = vpop.f32.mrf.mxu0
        %v1373 = vadd.f32 0.0, %v1372
        %v1374 = vpop.f32.mrf.mxu0
        %1375 = vdwg.mxu0
        %v1376 = vadd.f32 %v1300, %v1373
        %1377 = vst.msk [vmem:[%s1299] sm:$0xff] %vm821, %v1376
        %s1378 = scalar_lea.vmem [#allocation4], 16
        %v1379 = vld [vmem:[%s1378] sm:$0xff]
        %s1380 = scalar_lea.vmem %s700, 64
        %v1381 = vld [vmem:[%s1380] sm:$0xff]
        %v1382 = vld [vmem:[%s1380 + $0x8] sm:$0xff]
        %v1383 = vld [vmem:[%s1380 + $0x10] sm:$0xff]
        %v1384 = vld [vmem:[%s1380 + $0x18] sm:$0xff]
        %1385 = vmatprep.subr.mxu0 0.0
        %1386 = vmatpush1.msra.mxu0 0.0
        %1387 = vmatprep.subr.mxu0 0.0
        %1388 = vmatpush1.msra.mxu0 0.0
        %1389 = vmatprep.subr.mxu0 0.0
        %1390 = vmatpush1.msra.mxu0 0.0
        %1391 = vmatprep.subr.mxu0 0.0
        %1392 = vmatpush1.msra.mxu0 0.0
        %1393 = vmatprep.subr.mxu0 0.0
        %1394 = vmatpush1.msra.mxu0 0.0
        %1395 = vmatprep.subr.mxu0 0.0
        %1396 = vmatpush1.msra.mxu0 0.0
        %1397 = vmatprep.subr.mxu0 0.0
        %1398 = vmatpush1.msra.mxu0 0.0
        %1399 = vmatprep.subr.mxu0 0.0
        %1400 = vmatpush1.msra.mxu0 0.0
        %1401 = vmatprep.subr.mxu0 0.0
        %1402 = vmatpush1.msra.mxu0 0.0
        %1403 = vmatprep.subr.mxu0 0.0
        %1404 = vmatpush1.msra.mxu0 0.0
        %1405 = vmatprep.subr.mxu0 0.0
        %1406 = vmatpush1.msra.mxu0 0.0
        %1407 = vmatprep.subr.mxu0 0.0
        %1408 = vmatpush1.msra.mxu0 0.0
        %1409 = vmatprep.subr.mxu0 0.0
        %1410 = vmatpush1.msra.mxu0 %v1384
        %1411 = vmatprep.subr.mxu0 0.0
        %1412 = vmatpush1.msra.mxu0 %v1383
        %1413 = vmatprep.subr.mxu0 0.0
        %1414 = vmatpush1.msra.mxu0 %v1382
        %1415 = vmatprep.subr.mxu0 0.0
        %1416 = vmatpush1.msra.mxu0 %v1381
        %1417 = vmatprep.subr.mxu0 0.0
        %1418 = vmatpush2.msra.mxu0 0.0
        %1419 = vmatprep.subr.mxu0 0.0
        %1420 = vmatpush2.msra.mxu0 0.0
        %1421 = vmatprep.subr.mxu0 0.0
        %1422 = vmatpush2.msra.mxu0 0.0
        %1423 = vmatprep.subr.mxu0 0.0
        %1424 = vmatpush2.msra.mxu0 0.0
        %1425 = vmatprep.subr.mxu0 0.0
        %1426 = vmatpush2.msra.mxu0 0.0
        %1427 = vmatprep.subr.mxu0 0.0
        %1428 = vmatpush2.msra.mxu0 0.0
        %1429 = vmatprep.subr.mxu0 0.0
        %1430 = vmatpush2.msra.mxu0 0.0
        %1431 = vmatprep.subr.mxu0 0.0
        %1432 = vmatpush2.msra.mxu0 0.0
        %1433 = vmatprep.subr.mxu0 0.0
        %1434 = vmatpush2.msra.mxu0 0.0
        %1435 = vmatprep.subr.mxu0 0.0
        %1436 = vmatpush2.msra.mxu0 0.0
        %1437 = vmatprep.subr.mxu0 0.0
        %1438 = vmatpush2.msra.mxu0 0.0
        %1439 = vmatprep.subr.mxu0 0.0
        %1440 = vmatpush2.msra.mxu0 0.0
        %1441 = vmatprep.subr.mxu0 0.0
        %1442 = vmatpush2.msra.mxu0 0.0
        %1443 = vmatprep.subr.mxu0 0.0
        %1444 = vmatpush2.msra.mxu0 0.0
        %1445 = vmatprep.subr.mxu0 0.0
        %1446 = vmatpush2.msra.mxu0 0.0
        %1447 = vmatprep.subr.mxu0 0.0
        %1448 = vmatpush2.msra.mxu0 0.0
        %1449 = vmatprep.mubr.f32.mxu0 0.0
        %1450 = vmatmul.mubr.f32.gmra.mxu0 %v909
        %v1451 = vpop.f32.mrf.mxu0
        %v1452 = vadd.f32 0.0, %v1451
        %v1453 = vpop.f32.mrf.mxu0
        %1454 = vdwg.mxu0
        %v1455 = vadd.f32 %v1379, %v1452
        %1456 = vst.msk [vmem:[%s1378] sm:$0xff] %vm821, %v1455
        %s1457 = scalar_lea.vmem [#allocation2], 24
        %v1458 = vld [vmem:[%s1457] sm:$0xff]
        %s1459 = scalar_lea.vmem %s676, 96
        %v1460 = vld [vmem:[%s1459] sm:$0xff]
        %v1461 = vld [vmem:[%s1459 + $0x8] sm:$0xff]
        %v1462 = vld [vmem:[%s1459 + $0x10] sm:$0xff]
        %v1463 = vld [vmem:[%s1459 + $0x18] sm:$0xff]
        %1464 = vmatprep.subr.mxu0 0.0
        %1465 = vmatpush1.msra.mxu0 0.0
        %1466 = vmatprep.subr.mxu0 0.0
        %1467 = vmatpush1.msra.mxu0 0.0
        %1468 = vmatprep.subr.mxu0 0.0
        %1469 = vmatpush1.msra.mxu0 0.0
        %1470 = vmatprep.subr.mxu0 0.0
        %1471 = vmatpush1.msra.mxu0 0.0
        %1472 = vmatprep.subr.mxu0 0.0
        %1473 = vmatpush1.msra.mxu0 0.0
        %1474 = vmatprep.subr.mxu0 0.0
        %1475 = vmatpush1.msra.mxu0 0.0
        %1476 = vmatprep.subr.mxu0 0.0
        %1477 = vmatpush1.msra.mxu0 0.0
        %1478 = vmatprep.subr.mxu0 0.0
        %1479 = vmatpush1.msra.mxu0 0.0
        %1480 = vmatprep.subr.mxu0 0.0
        %1481 = vmatpush1.msra.mxu0 0.0
        %1482 = vmatprep.subr.mxu0 0.0
        %1483 = vmatpush1.msra.mxu0 0.0
        %1484 = vmatprep.subr.mxu0 0.0
        %1485 = vmatpush1.msra.mxu0 0.0
        %1486 = vmatprep.subr.mxu0 0.0
        %1487 = vmatpush1.msra.mxu0 0.0
        %1488 = vmatprep.subr.mxu0 0.0
        %1489 = vmatpush1.msra.mxu0 %v1463
        %1490 = vmatprep.subr.mxu0 0.0
        %1491 = vmatpush1.msra.mxu0 %v1462
        %1492 = vmatprep.subr.mxu0 0.0
        %1493 = vmatpush1.msra.mxu0 %v1461
        %1494 = vmatprep.subr.mxu0 0.0
        %1495 = vmatpush1.msra.mxu0 %v1460
        %1496 = vmatprep.subr.mxu0 0.0
        %1497 = vmatpush2.msra.mxu0 0.0
        %1498 = vmatprep.subr.mxu0 0.0
        %1499 = vmatpush2.msra.mxu0 0.0
        %1500 = vmatprep.subr.mxu0 0.0
        %1501 = vmatpush2.msra.mxu0 0.0
        %1502 = vmatprep.subr.mxu0 0.0
        %1503 = vmatpush2.msra.mxu0 0.0
        %1504 = vmatprep.subr.mxu0 0.0
        %1505 = vmatpush2.msra.mxu0 0.0
        %1506 = vmatprep.subr.mxu0 0.0
        %1507 = vmatpush2.msra.mxu0 0.0
        %1508 = vmatprep.subr.mxu0 0.0
        %1509 = vmatpush2.msra.mxu0 0.0
        %1510 = vmatprep.subr.mxu0 0.0
        %1511 = vmatpush2.msra.mxu0 0.0
        %1512 = vmatprep.subr.mxu0 0.0
        %1513 = vmatpush2.msra.mxu0 0.0
        %1514 = vmatprep.subr.mxu0 0.0
        %1515 = vmatpush2.msra.mxu0 0.0
        %1516 = vmatprep.subr.mxu0 0.0
        %1517 = vmatpush2.msra.mxu0 0.0
        %1518 = vmatprep.subr.mxu0 0.0
        %1519 = vmatpush2.msra.mxu0 0.0
        %1520 = vmatprep.subr.mxu0 0.0
        %1521 = vmatpush2.msra.mxu0 0.0
        %1522 = vmatprep.subr.mxu0 0.0
        %1523 = vmatpush2.msra.mxu0 0.0
        %1524 = vmatprep.subr.mxu0 0.0
        %1525 = vmatpush2.msra.mxu0 0.0
        %1526 = vmatprep.subr.mxu0 0.0
        %1527 = vmatpush2.msra.mxu0 0.0
        %1528 = vmatprep.mubr.f32.mxu0 0.0
        %1529 = vmatmul.mubr.f32.gmra.mxu0 %v748
        %v1530 = vpop.f32.mrf.mxu0
        %v1531 = vadd.f32 0.0, %v1530
        %v1532 = vpop.f32.mrf.mxu0
        %1533 = vdwg.mxu0
        %v1534 = vadd.f32 %v1458, %v1531
        %1535 = vst.msk [vmem:[%s1457] sm:$0xff] %vm821, %v1534
        %s1536 = scalar_lea.vmem [#allocation3], 24
        %v1537 = vld [vmem:[%s1536] sm:$0xff]
        %s1538 = scalar_lea.vmem %s688, 96
        %v1539 = vld [vmem:[%s1538] sm:$0xff]
        %v1540 = vld [vmem:[%s1538 + $0x8] sm:$0xff]
        %v1541 = vld [vmem:[%s1538 + $0x10] sm:$0xff]
        %v1542 = vld [vmem:[%s1538 + $0x18] sm:$0xff]
        %1543 = vmatprep.subr.mxu0 0.0
        %1544 = vmatpush1.msra.mxu0 0.0
        %1545 = vmatprep.subr.mxu0 0.0
        %1546 = vmatpush1.msra.mxu0 0.0
        %1547 = vmatprep.subr.mxu0 0.0
        %1548 = vmatpush1.msra.mxu0 0.0
        %1549 = vmatprep.subr.mxu0 0.0
        %1550 = vmatpush1.msra.mxu0 0.0
        %1551 = vmatprep.subr.mxu0 0.0
        %1552 = vmatpush1.msra.mxu0 0.0
        %1553 = vmatprep.subr.mxu0 0.0
        %1554 = vmatpush1.msra.mxu0 0.0
        %1555 = vmatprep.subr.mxu0 0.0
        %1556 = vmatpush1.msra.mxu0 0.0
        %1557 = vmatprep.subr.mxu0 0.0
        %1558 = vmatpush1.msra.mxu0 0.0
        %1559 = vmatprep.subr.mxu0 0.0
        %1560 = vmatpush1.msra.mxu0 0.0
        %1561 = vmatprep.subr.mxu0 0.0
        %1562 = vmatpush1.msra.mxu0 0.0
        %1563 = vmatprep.subr.mxu0 0.0
        %1564 = vmatpush1.msra.mxu0 0.0
        %1565 = vmatprep.subr.mxu0 0.0
        %1566 = vmatpush1.msra.mxu0 0.0
        %1567 = vmatprep.subr.mxu0 0.0
        %1568 = vmatpush1.msra.mxu0 %v1542
        %1569 = vmatprep.subr.mxu0 0.0
        %1570 = vmatpush1.msra.mxu0 %v1541
        %1571 = vmatprep.subr.mxu0 0.0
        %1572 = vmatpush1.msra.mxu0 %v1540
        %1573 = vmatprep.subr.mxu0 0.0
        %1574 = vmatpush1.msra.mxu0 %v1539
        %1575 = vmatprep.subr.mxu0 0.0
        %1576 = vmatpush2.msra.mxu0 0.0
        %1577 = vmatprep.subr.mxu0 0.0
        %1578 = vmatpush2.msra.mxu0 0.0
        %1579 = vmatprep.subr.mxu0 0.0
        %1580 = vmatpush2.msra.mxu0 0.0
        %1581 = vmatprep.subr.mxu0 0.0
        %1582 = vmatpush2.msra.mxu0 0.0
        %1583 = vmatprep.subr.mxu0 0.0
        %1584 = vmatpush2.msra.mxu0 0.0
        %1585 = vmatprep.subr.mxu0 0.0
        %1586 = vmatpush2.msra.mxu0 0.0
        %1587 = vmatprep.subr.mxu0 0.0
        %1588 = vmatpush2.msra.mxu0 0.0
        %1589 = vmatprep.subr.mxu0 0.0
        %1590 = vmatpush2.msra.mxu0 0.0
        %1591 = vmatprep.subr.mxu0 0.0
        %1592 = vmatpush2.msra.mxu0 0.0
        %1593 = vmatprep.subr.mxu0 0.0
        %1594 = vmatpush2.msra.mxu0 0.0
        %1595 = vmatprep.subr.mxu0 0.0
        %1596 = vmatpush2.msra.mxu0 0.0
        %1597 = vmatprep.subr.mxu0 0.0
        %1598 = vmatpush2.msra.mxu0 0.0
        %1599 = vmatprep.subr.mxu0 0.0
        %1600 = vmatpush2.msra.mxu0 0.0
        %1601 = vmatprep.subr.mxu0 0.0
        %1602 = vmatpush2.msra.mxu0 0.0
        %1603 = vmatprep.subr.mxu0 0.0
        %1604 = vmatpush2.msra.mxu0 0.0
        %1605 = vmatprep.subr.mxu0 0.0
        %1606 = vmatpush2.msra.mxu0 0.0
        %1607 = vmatprep.mubr.f32.mxu0 0.0
        %1608 = vmatmul.mubr.f32.gmra.mxu0 %v829
        %v1609 = vpop.f32.mrf.mxu0
        %v1610 = vadd.f32 0.0, %v1609
        %v1611 = vpop.f32.mrf.mxu0
        %1612 = vdwg.mxu0
        %v1613 = vadd.f32 %v1537, %v1610
        %1614 = vst.msk [vmem:[%s1536] sm:$0xff] %vm821, %v1613
        %s1615 = scalar_lea.vmem [#allocation4], 24
        %v1616 = vld [vmem:[%s1615] sm:$0xff]
        %s1617 = scalar_lea.vmem %s700, 96
        %v1618 = vld [vmem:[%s1617] sm:$0xff]
        %v1619 = vld [vmem:[%s1617 + $0x8] sm:$0xff]
        %v1620 = vld [vmem:[%s1617 + $0x10] sm:$0xff]
        %v1621 = vld [vmem:[%s1617 + $0x18] sm:$0xff]
        %1622 = vmatprep.subr.mxu0 0.0
        %1623 = vmatpush1.msra.mxu0 0.0
        %1624 = vmatprep.subr.mxu0 0.0
        %1625 = vmatpush1.msra.mxu0 0.0
        %1626 = vmatprep.subr.mxu0 0.0
        %1627 = vmatpush1.msra.mxu0 0.0
        %1628 = vmatprep.subr.mxu0 0.0
        %1629 = vmatpush1.msra.mxu0 0.0
        %1630 = vmatprep.subr.mxu0 0.0
        %1631 = vmatpush1.msra.mxu0 0.0
        %1632 = vmatprep.subr.mxu0 0.0
        %1633 = vmatpush1.msra.mxu0 0.0
        %1634 = vmatprep.subr.mxu0 0.0
        %1635 = vmatpush1.msra.mxu0 0.0
        %1636 = vmatprep.subr.mxu0 0.0
        %1637 = vmatpush1.msra.mxu0 0.0
        %1638 = vmatprep.subr.mxu0 0.0
        %1639 = vmatpush1.msra.mxu0 0.0
        %1640 = vmatprep.subr.mxu0 0.0
        %1641 = vmatpush1.msra.mxu0 0.0
        %1642 = vmatprep.subr.mxu0 0.0
        %1643 = vmatpush1.msra.mxu0 0.0
        %1644 = vmatprep.subr.mxu0 0.0
        %1645 = vmatpush1.msra.mxu0 0.0
        %1646 = vmatprep.subr.mxu0 0.0
        %1647 = vmatpush1.msra.mxu0 %v1621
        %1648 = vmatprep.subr.mxu0 0.0
        %1649 = vmatpush1.msra.mxu0 %v1620
        %1650 = vmatprep.subr.mxu0 0.0
        %1651 = vmatpush1.msra.mxu0 %v1619
        %1652 = vmatprep.subr.mxu0 0.0
        %1653 = vmatpush1.msra.mxu0 %v1618
        %1654 = vmatprep.subr.mxu0 0.0
        %1655 = vmatpush2.msra.mxu0 0.0
        %1656 = vmatprep.subr.mxu0 0.0
        %1657 = vmatpush2.msra.mxu0 0.0
        %1658 = vmatprep.subr.mxu0 0.0
        %1659 = vmatpush2.msra.mxu0 0.0
        %1660 = vmatprep.subr.mxu0 0.0
        %1661 = vmatpush2.msra.mxu0 0.0
        %1662 = vmatprep.subr.mxu0 0.0
        %1663 = vmatpush2.msra.mxu0 0.0
        %1664 = vmatprep.subr.mxu0 0.0
        %1665 = vmatpush2.msra.mxu0 0.0
        %1666 = vmatprep.subr.mxu0 0.0
        %1667 = vmatpush2.msra.mxu0 0.0
        %1668 = vmatprep.subr.mxu0 0.0
        %1669 = vmatpush2.msra.mxu0 0.0
        %1670 = vmatprep.subr.mxu0 0.0
        %1671 = vmatpush2.msra.mxu0 0.0
        %1672 = vmatprep.subr.mxu0 0.0
        %1673 = vmatpush2.msra.mxu0 0.0
        %1674 = vmatprep.subr.mxu0 0.0
        %1675 = vmatpush2.msra.mxu0 0.0
        %1676 = vmatprep.subr.mxu0 0.0
        %1677 = vmatpush2.msra.mxu0 0.0
        %1678 = vmatprep.subr.mxu0 0.0
        %1679 = vmatpush2.msra.mxu0 0.0
        %1680 = vmatprep.subr.mxu0 0.0
        %1681 = vmatpush2.msra.mxu0 0.0
        %1682 = vmatprep.subr.mxu0 0.0
        %1683 = vmatpush2.msra.mxu0 0.0
        %1684 = vmatprep.subr.mxu0 0.0
        %1685 = vmatpush2.msra.mxu0 0.0
        %1686 = vmatprep.mubr.f32.mxu0 0.0
        %1687 = vmatmul.mubr.f32.gmra.mxu0 %v909
        %v1688 = vpop.f32.mrf.mxu0
        %v1689 = vadd.f32 0.0, %v1688
        %v1690 = vpop.f32.mrf.mxu0
        %1691 = vdwg.mxu0
        %v1692 = vadd.f32 %v1616, %v1689
        %1693 = vst.msk [vmem:[%s1615] sm:$0xff] %vm821, %v1692
        // Predicated region
        $region61: #{tpu_custom_call.1} parent=55 // pred_check
          %p1694 = pneg %p721
        $region62: #{tpu_custom_call.1} parent=55 // pred_check_branch
          %1696 = sbr.rel (%p1694) target = $region64
        $region63: #{tpu_custom_call.1} parent=55 // pred_region
          %v1697 = vld [vmem:[#allocation2] sm:$0xff]
          %v1698 = vld [vmem:[#allocation2 + $0x8] sm:$0xff]
          %v1699 = vld [vmem:[#allocation2 + $0x10] sm:$0xff]
          %v1700 = vld [vmem:[#allocation2 + $0x18] sm:$0xff]
          %v1701 = vld [vmem:[%s706] sm:$0x1]
          %v1702 = vld [vmem:[%s706 + $0x1] sm:$0x1]
          %v1703 = vld [vmem:[%s706 + $0x2] sm:$0x1]
          %v1704 = vld [vmem:[%s706 + $0x3] sm:$0x1]
          %v1709 = vlaneseq
          %v1710 = vshrl.u32 %v1709, 7
          %v1711 = vsub.s32 0, %v1710
          %v1712 = vrot.slane %v1701, %v1711
          %v1713 = vlaneseq
          %v1714 = vshrl.u32 %v1713, 7
          %v1715 = vsub.s32 0, %v1714
          %v1716 = vrot.slane %v1702, %v1715
          %v1717 = vlaneseq
          %v1718 = vshrl.u32 %v1717, 7
          %v1719 = vsub.s32 0, %v1718
          %v1720 = vrot.slane %v1703, %v1719
          %v1721 = vlaneseq
          %v1722 = vshrl.u32 %v1721, 7
          %v1723 = vsub.s32 0, %v1722
          %v1724 = vrot.slane %v1704, %v1723
          %v1729 = vadd.f32 %v1697, %v1712
          %v1730 = vadd.f32 %v1698, %v1716
          %v1731 = vadd.f32 %v1699, %v1720
          %v1732 = vadd.f32 %v1700, %v1724
          %1733 = vst.msk [vmem:[%s622] sm:$0xff] %vm821, %v1729
          %1734 = vst.msk [vmem:[%s622 + $0x8] sm:$0xff] %vm821, %v1730
          %1735 = vst.msk [vmem:[%s622 + $0x10] sm:$0xff] %vm821, %v1731
          %1736 = vst.msk [vmem:[%s622 + $0x18] sm:$0xff] %vm821, %v1732
          %v1737 = vld [vmem:[#allocation3] sm:$0xff]
          %v1738 = vld [vmem:[#allocation3 + $0x8] sm:$0xff]
          %v1739 = vld [vmem:[#allocation3 + $0x10] sm:$0xff]
          %v1740 = vld [vmem:[#allocation3 + $0x18] sm:$0xff]
          %v1741 = vld [vmem:[%s711] sm:$0x1]
          %v1742 = vld [vmem:[%s711 + $0x1] sm:$0x1]
          %v1743 = vld [vmem:[%s711 + $0x2] sm:$0x1]
          %v1744 = vld [vmem:[%s711 + $0x3] sm:$0x1]
          %v1749 = vlaneseq
          %v1750 = vshrl.u32 %v1749, 7
          %v1751 = vsub.s32 0, %v1750
          %v1752 = vrot.slane %v1741, %v1751
          %v1753 = vlaneseq
          %v1754 = vshrl.u32 %v1753, 7
          %v1755 = vsub.s32 0, %v1754
          %v1756 = vrot.slane %v1742, %v1755
          %v1757 = vlaneseq
          %v1758 = vshrl.u32 %v1757, 7
          %v1759 = vsub.s32 0, %v1758
          %v1760 = vrot.slane %v1743, %v1759
          %v1761 = vlaneseq
          %v1762 = vshrl.u32 %v1761, 7
          %v1763 = vsub.s32 0, %v1762
          %v1764 = vrot.slane %v1744, %v1763
          %v1769 = vadd.f32 %v1737, %v1752
          %v1770 = vadd.f32 %v1738, %v1756
          %v1771 = vadd.f32 %v1739, %v1760
          %v1772 = vadd.f32 %v1740, %v1764
          %1773 = vst.msk [vmem:[%s629] sm:$0xff] %vm821, %v1769
          %1774 = vst.msk [vmem:[%s629 + $0x8] sm:$0xff] %vm821, %v1770
          %1775 = vst.msk [vmem:[%s629 + $0x10] sm:$0xff] %vm821, %v1771
          %1776 = vst.msk [vmem:[%s629 + $0x18] sm:$0xff] %vm821, %v1772
          %v1777 = vld [vmem:[#allocation4] sm:$0xff]
          %v1778 = vld [vmem:[#allocation4 + $0x8] sm:$0xff]
          %v1779 = vld [vmem:[#allocation4 + $0x10] sm:$0xff]
          %v1780 = vld [vmem:[#allocation4 + $0x18] sm:$0xff]
          %v1781 = vld [vmem:[%s716] sm:$0x1]
          %v1782 = vld [vmem:[%s716 + $0x1] sm:$0x1]
          %v1783 = vld [vmem:[%s716 + $0x2] sm:$0x1]
          %v1784 = vld [vmem:[%s716 + $0x3] sm:$0x1]
          %v1789 = vlaneseq
          %v1790 = vshrl.u32 %v1789, 7
          %v1791 = vsub.s32 0, %v1790
          %v1792 = vrot.slane %v1781, %v1791
          %v1793 = vlaneseq
          %v1794 = vshrl.u32 %v1793, 7
          %v1795 = vsub.s32 0, %v1794
          %v1796 = vrot.slane %v1782, %v1795
          %v1797 = vlaneseq
          %v1798 = vshrl.u32 %v1797, 7
          %v1799 = vsub.s32 0, %v1798
          %v1800 = vrot.slane %v1783, %v1799
          %v1801 = vlaneseq
          %v1802 = vshrl.u32 %v1801, 7
          %v1803 = vsub.s32 0, %v1802
          %v1804 = vrot.slane %v1784, %v1803
          %v1809 = vadd.f32 %v1777, %v1792
          %v1810 = vadd.f32 %v1778, %v1796
          %v1811 = vadd.f32 %v1779, %v1800
          %v1812 = vadd.f32 %v1780, %v1804
          %1813 = vst.msk [vmem:[%s636] sm:$0xff] %vm821, %v1809
          %1814 = vst.msk [vmem:[%s636 + $0x8] sm:$0xff] %vm821, %v1810
          %1815 = vst.msk [vmem:[%s636 + $0x10] sm:$0xff] %vm821, %v1811
          %1816 = vst.msk [vmem:[%s636 + $0x18] sm:$0xff] %vm821, %v1812
        $region64: #{tpu_custom_call.1} parent=55 // pred_fallthru
          _
        %s1817 = sand.u32 %s319, 1
        %s1818 = scalar_lea.sflag [#allocation6], %s1817
        %s1819 = sand.u32 %s319, 1
        %s1820 = smul.addr %s1819, 32
        %s1821 = scalar_lea.vmem [#allocation5], %s1820
        %s1822 = sand.u32 %s29, 1
        %s1823 = scalar_lea.sflag [#allocation8], %s1822
        %s1824 = sand.u32 %s349, 1
        %s1825 = smul.addr %s1824, 32
        %s1826 = scalar_lea.vmem [#allocation7], %s1825
        %s1827 = sand.u32 %s29, 1
        %s1828 = scalar_lea.sflag [#allocation8], %s1827
        %s1829 = sand.u32 %s379, 1
        %s1830 = smul.addr %s1829, 32
        %s1831 = scalar_lea.vmem [#allocation9], %s1830
        // Predicated region
        $region65: #{tpu_custom_call.1} parent=55 // pred_check
          %p1832 = pneg %p329
        $region66: #{tpu_custom_call.1} parent=55 // pred_check_branch
          %1834 = sbr.rel (%p1832) target = $region68
        $region67: #{tpu_custom_call.1} parent=55 // pred_region
          %s1835 = smul.u32 4, %s37
          %s1837 = ssub.s32 512, 512
          %1838 = vsyncadd %s1818, %s1837
          %s1839 = sadd.s32 %s36, %s1835
          %s1840 = smul.addr %s35, 4
          %s1841 = sadd.s32 %s1839, %s1840
          %s1842 = smul.addr %s1841, 128
          %s1843 = scalar_lea.hbm %s9, %s1842
          %s1844 = sshll.u32 %s1821, 4
          %s1845 = int_to_ptr.vmem [resolvable:$true] %s1844
          %1850 = dma.vmem_to_hbm [thread:$0]  %s1845, 512, %s1843, %s1818, 128, 128, 8
        $region68: #{tpu_custom_call.1} parent=55 // pred_fallthru
          _
        // Predicated region
        $region69: #{tpu_custom_call.1} parent=55 // pred_check
          %p1851 = pneg %p359
        $region70: #{tpu_custom_call.1} parent=55 // pred_check_branch
          %1853 = sbr.rel (%p1851) target = $region72
        $region71: #{tpu_custom_call.1} parent=55 // pred_region
          %s1854 = smul.u32 4, %s37
          %s1856 = ssub.s32 512, 512
          %1857 = vsyncadd %s1823, %s1856
          %s1858 = sadd.s32 %s36, %s1854
          %s1859 = smul.addr %s35, 4
          %s1860 = sadd.s32 %s1858, %s1859
          %s1861 = smul.addr %s1860, 128
          %s1862 = scalar_lea.hbm %s10, %s1861
          %s1863 = sshll.u32 %s1826, 4
          %s1864 = int_to_ptr.vmem [resolvable:$true] %s1863
          %1869 = dma.vmem_to_hbm [thread:$0]  %s1864, 512, %s1862, %s1823, 128, 128, 8
        $region72: #{tpu_custom_call.1} parent=55 // pred_fallthru
          _
        // Predicated region
        $region73: #{tpu_custom_call.1} parent=55 // pred_check
          %p1870 = pneg %p389
        $region74: #{tpu_custom_call.1} parent=55 // pred_check_branch
          %1872 = sbr.rel (%p1870) target = $region76
        $region75: #{tpu_custom_call.1} parent=55 // pred_region
          %s1873 = smul.u32 4, %s37
          %s1875 = ssub.s32 512, 512
          %1876 = vsyncadd %s1828, %s1875
          %s1877 = sadd.s32 %s36, %s1873
          %s1878 = smul.addr %s35, 4
          %s1879 = sadd.s32 %s1877, %s1878
          %s1880 = smul.addr %s1879, 128
          %s1881 = scalar_lea.hbm %s11, %s1880
          %s1882 = sshll.u32 %s1831, 4
          %s1883 = int_to_ptr.vmem [resolvable:$true] %s1882
          %1888 = dma.vmem_to_hbm [thread:$0]  %s1883, 512, %s1881, %s1828, 128, 128, 8
        $region76: #{tpu_custom_call.1} parent=55 // pred_fallthru
          _
      $region56: #{tpu_custom_call.1} parent=5 // pred_fallthru
        _
      %p1889 = scmp.le.s32.totalorder 2, %s24
      // Predicated region
      $region77: #{tpu_custom_call.1} parent=5 // pred_check
        %p1890 = pneg %p1889
      $region78: #{tpu_custom_call.1} parent=5 // pred_check_branch
        %1892 = sbr.rel (%p1890) target = $region80
      $region79: #{tpu_custom_call.1} parent=5 // pred_region
        %s1893 = ssub.s32 %s24, 2
        // Predicated region
        $region81: #{tpu_custom_call.1} parent=79 // pred_check
          %p1894 = pneg %p335
        $region82: #{tpu_custom_call.1} parent=79 // pred_check_branch
          %1896 = sbr.rel (%p1894) target = $region84
        $region83: #{tpu_custom_call.1} parent=79 // pred_region
          %s1897 = sand.u32 %s320, 1
          %s1898 = scalar_lea.sflag [#allocation6], %s1897
          %s1899 = sand.u32 %s320, 1
          %s1900 = smul.addr %s1899, 32
          %s1901 = scalar_lea.vmem [#allocation5], %s1900
          %1902 = dma.done %s1898, 512
        $region84: #{tpu_custom_call.1} parent=79 // pred_fallthru
          _
        // Predicated region
        $region85: #{tpu_custom_call.1} parent=79 // pred_check
          %p1903 = pneg %p365
        $region86: #{tpu_custom_call.1} parent=79 // pred_check_branch
          %1905 = sbr.rel (%p1903) target = $region88
        $region87: #{tpu_custom_call.1} parent=79 // pred_region
          %s1906 = sand.u32 %s30, 1
          %s1907 = scalar_lea.sflag [#allocation8], %s1906
          %s1908 = sand.u32 %s350, 1
          %s1909 = smul.addr %s1908, 32
          %s1910 = scalar_lea.vmem [#allocation7], %s1909
          %1911 = dma.done %s1907, 512
        $region88: #{tpu_custom_call.1} parent=79 // pred_fallthru
          _
        // Predicated region
        $region89: #{tpu_custom_call.1} parent=79 // pred_check
          %p1912 = pneg %p395
        $region90: #{tpu_custom_call.1} parent=79 // pred_check_branch
          %1914 = sbr.rel (%p1912) target = $region92
        $region91: #{tpu_custom_call.1} parent=79 // pred_region
          %s1915 = sand.u32 %s30, 1
          %s1916 = scalar_lea.sflag [#allocation8], %s1915
          %s1917 = sand.u32 %s380, 1
          %s1918 = smul.addr %s1917, 32
          %s1919 = scalar_lea.vmem [#allocation9], %s1918
          %1920 = dma.done %s1916, 512
        $region92: #{tpu_custom_call.1} parent=79 // pred_fallthru
          _
      $region80: #{tpu_custom_call.1} parent=5 // pred_fallthru
        _
    $region6: #{tpu_custom_call.1} parent=1 // loop_footer
      %s28 = sadd.s32 1, %s24
    $region7: #{tpu_custom_call.1} parent=1 // loop_footer_branch
      %23 = sbr.rel target = $region3
    $region8: #{tpu_custom_call.1} parent=1 // loop_exit
      _
    %1921 = vsyncpa [#allocation6], 1
    %s1922 = scalar_lea.sflag [#allocation6], 1
    %1923 = vsyncpa %s1922, 1
    %1924 = vsyncpa [#allocation8], 1
    %s1925 = scalar_lea.sflag [#allocation8], 1
    %1926 = vsyncpa %s1925, 1

</llo_original>
